<compile_context>
chip_gen: v7x
topology: tpu7x:2x2x1
jax: 0.10.0
libtpu: 0.0.40
codegen_flags: <defaults>
</compile_context>

<pallas_src>
import functools

import jax
import jax.numpy as jnp
from jax import lax
from jax.experimental import pallas as pl
from jax.experimental.pallas import tpu as pltpu


def _loss_kernel(x_out_ref, x_img_ref, wt_ref, b_ref, sum_ref, match_ref, *,
                 num_classes, c_in, chunk_rows, num_chunks, unroll):
    """One grid step = one (batch b, pixel-tile t) block.

    x_*_ref   : (c_in, sub_tile, 128) VMEM, pixels lane-dense (native NCHW view)
    wt_ref    : (num_classes * c_in,) f32 SMEM, flattened -> wt[k * c_in + c]
    b_ref     : (num_classes,)        f32 SMEM
    sum_ref   : (chunk_rows, 128) f32 per-(b,t) partial |diff| block
    match_ref : (chunk_rows, 128) f32 per-(b,t) partial match-count block
    """
    # Hoist weight / bias SCALAR reads out of the chunk loop.  These stay in
    # sregs / SMEM; they are never pre-broadcast into vregs (would spill).
    wk = [[wt_ref[k * c_in + c] for c in range(c_in)] for k in range(num_classes)]
    bk = [b_ref[k] for k in range(num_classes)]

    def chunk_body(ci, carry):
        abs_tot, match_tot = carry
        r0 = pl.multiple_of(ci * chunk_rows, chunk_rows)
        sl = pl.ds(r0, chunk_rows)
        # Cast per chunk inside the kernel (no wrapper-side full-HBM upcast).
        xo = [x_out_ref[c, sl, :].astype(jnp.float32) for c in range(c_in)]
        xg = [x_img_ref[c, sl, :].astype(jnp.float32) for c in range(c_in)]
        d = [xo[c] - xg[c] for c in range(c_in)]

        def cls(k):
            # Merged head: class-k logits for `outputs` and the class-k
            # projection of the per-channel difference (bias cancels in dk).
            lo = xo[0] * wk[k][0]
            dk = d[0] * wk[k][0]
            for c in range(1, c_in):
                lo = lo + xo[c] * wk[k][c]
                dk = dk + d[c] * wk[k][c]
            return lo + bk[k], dk

        lo, dk = cls(0)
        abs_acc = jnp.abs(dk)
        max_o = lo
        max_g = lo - dk
        arg_o = jnp.zeros((chunk_rows, 128), jnp.int32)
        arg_g = jnp.zeros((chunk_rows, 128), jnp.int32)
        for k in range(1, num_classes):
            lo, dk = cls(k)
            lg = lo - dk
            abs_acc = abs_acc + jnp.abs(dk)
            upd_o = lo > max_o            # strict ">" keeps first-occurrence argmax
            max_o = jnp.where(upd_o, lo, max_o)
            arg_o = jnp.where(upd_o, k, arg_o)
            upd_g = lg > max_g
            max_g = jnp.where(upd_g, lg, max_g)
            arg_g = jnp.where(upd_g, k, arg_g)

        abs_tot = abs_tot + abs_acc
        match_tot = match_tot + (arg_o == arg_g).astype(jnp.float32)
        return abs_tot, match_tot

    init = (jnp.zeros((chunk_rows, 128), jnp.float32),
            jnp.zeros((chunk_rows, 128), jnp.float32))
    abs_tot, match_tot = lax.fori_loop(0, num_chunks, chunk_body, init,
                                       unroll=unroll)
    # Single store per grid step; no carried dependence through the output refs.
    sum_ref[...] = abs_tot
    match_ref[...] = match_tot


def deeplabv3_loss(outputs, imgs, w, b, *, tile_pixels=65536):
    """outputs, imgs: NCHW float [B, C_in, H, W]; w: [C_in, NC]; b: [NC].

    Returns (L1 loss between head(outputs) and head(imgs), pixel accuracy).
    """
    B, C, H, W = outputs.shape
    NC = w.shape[1]
    HW = H * W
    N = B * HW

    # Native NCHW layout viewed as (B, C, rows, 128): pixels sit on the
    # 128-lane axis, no transpose pass over HBM.
    n128 = pl.cdiv(HW, 128)
    CHUNK = 16                                  # rows per in-kernel chunk
    max_rows = max(CHUNK, tile_pixels // 128)   # rows per grid step (default 512)
    if n128 <= CHUNK:
        n_t, sub_tile, chunk_rows = 1, n128, n128   # block == full dim (legal)
    else:
        chunk_rows = CHUNK
        n_t = pl.cdiv(n128, max_rows)
        sub_tile = pl.cdiv(pl.cdiv(n128, n_t), CHUNK) * CHUNK
    num_chunks = sub_tile // chunk_rows
    unroll = min(num_chunks, 8)
    HW_pad = n_t * sub_tile * 128

    def prep(x):
        x = jnp.asarray(x).reshape(B, C, HW)    # native dtype, free reshape
        if HW_pad != HW:
            # TODO(synk): only non-aligned H*W pay this one pad copy; padded
            # zero pixels contribute 0 to |diff| and deterministically "match",
            # corrected in the accuracy normalization below.
            x = jnp.pad(x, ((0, 0), (0, 0), (0, HW_pad - HW)))
        return x.reshape(B, C, n_t * sub_tile, 128)

    x_out = prep(outputs)
    x_img = prep(imgs)
    wt = jnp.asarray(w, jnp.float32).T.reshape(-1)   # flat (NC*C,), wt[k*C + c]
    bv = jnp.asarray(b, jnp.float32).reshape(NC)

    kernel = functools.partial(
        _loss_kernel, num_classes=NC, c_in=C,
        chunk_rows=chunk_rows, num_chunks=num_chunks, unroll=unroll)

    sum_acc, match_acc = pl.pallas_call(
        kernel,
        out_shape=(jax.ShapeDtypeStruct((B, n_t, chunk_rows, 128), jnp.float32),
                   jax.ShapeDtypeStruct((B, n_t, chunk_rows, 128), jnp.float32)),
        grid_spec=pltpu.PrefetchScalarGridSpec(
            num_scalar_prefetch=0,
            grid=(B, n_t),
            in_specs=[
                pl.BlockSpec((None, C, sub_tile, 128),
                             lambda bb, tt: (bb, 0, tt, 0)),
                pl.BlockSpec((None, C, sub_tile, 128),
                             lambda bb, tt: (bb, 0, tt, 0)),
                pl.BlockSpec(memory_space=pltpu.MemorySpace.SMEM),
                pl.BlockSpec(memory_space=pltpu.MemorySpace.SMEM),
            ],
            out_specs=[
                pl.BlockSpec((None, None, chunk_rows, 128),
                             lambda bb, tt: (bb, tt, 0, 0)),
                pl.BlockSpec((None, None, chunk_rows, 128),
                             lambda bb, tt: (bb, tt, 0, 0)),
            ],
        ),
        compiler_params=pltpu.CompilerParams(
            dimension_semantics=("parallel", "parallel"),
            vmem_limit_bytes=32 << 20),
    )(x_out, x_img, wt, bv)

    # Single final reduction (XLA tree-reduce over the per-lane partials).
    loss = jnp.sum(sum_acc) / jnp.float32(N * NC)
    pad_matches = jnp.float32(B * (HW_pad - HW))   # padded pixels always "match"
    accuracy = (jnp.sum(match_acc) - pad_matches) / jnp.float32(N)
    return loss, accuracy


def _reference(outputs, imgs, w, b):
    """Pure-JAX reference of the same semantics (for sanity check)."""
    def head(x):  # NCHW -> NHWC logits
        return jnp.einsum("bchw,ck->bhwk", x, w) + b
    r, g = head(outputs), head(imgs)
    loss = jnp.mean(jnp.abs(r - g))
    acc = jnp.mean((jnp.argmax(r, -1) == jnp.argmax(g, -1)).astype(jnp.float32))
    return loss, acc


if __name__ == "__main__":
    key = jax.random.PRNGKey(0)
    k_out, k_img, k_w, k_b = jax.random.split(key, 4)

    B, C_IN, H, W = 2, 3, 16, 16
    NUM_CLASSES = 21

    # "outputs" = generated images, "imgs" = ground-truth images (NCHW).
    outputs = jax.random.normal(k_out, (B, C_IN, H, W), dtype=jnp.float32)
    imgs = jax.random.normal(k_img, (B, C_IN, H, W), dtype=jnp.float32)

    # Deterministic surrogate segmentation-head parameters (1x1 conv).
    w = 0.1 * jax.random.normal(k_w, (C_IN, NUM_CLASSES), dtype=jnp.float32)
    b = 0.01 * jax.random.normal(k_b, (NUM_CLASSES,), dtype=jnp.float32)

    loss, acc = jax.jit(deeplabv3_loss, static_argnames=("tile_pixels",))(
        outputs, imgs, w, b)
    jax.block_until_ready((loss, acc))

    ref_loss, ref_acc = _reference(outputs, imgs, w, b)
    assert jnp.allclose(loss, ref_loss, rtol=1e-5, atol=1e-6), (loss, ref_loss)
    # Accuracy: allow a couple of argmax flips from float summation order.
    assert abs(float(acc) - float(ref_acc)) <= 2.5 / (B * H * W) + 1e-6, (acc, ref_acc)

    print("KERNEL_OK")
</pallas_src>

<mosaic_0001>
module attributes {stable_mosaic.version = 11 : i64} {
  func.func @_loss_kernel(%arg0: i32, %arg1: i32, %arg2: memref<1x3x2x128xf32, #tpu.memory_space<vmem>>, %arg3: memref<1x3x2x128xf32, #tpu.memory_space<vmem>>, %arg4: memref<63xf32, #tpu.memory_space<smem>>, %arg5: memref<21xf32, #tpu.memory_space<smem>>, %arg6: memref<1x1x2x128xf32, #tpu.memory_space<vmem>>, %arg7: memref<1x1x2x128xf32, #tpu.memory_space<vmem>>) attributes {dimension_semantics = [#tpu.dimension_semantics<parallel>, #tpu.dimension_semantics<parallel>], iteration_bounds = array<i64: 2, 1>, scalar_prefetch = 0 : i64, scratch_operands = 0 : i64, tpu.core_type = #tpu.core_type<tc>, window_params = [{transform_indices = @transform_0, window_bounds = array<i64: 1, 3, 2, 128>}, {transform_indices = @transform_1, window_bounds = array<i64: 1, 3, 2, 128>}, {transform_indices = @transform_2, window_bounds = array<i64: 63>}, {transform_indices = @transform_3, window_bounds = array<i64: 21>}, {transform_indices = @transform_4, window_bounds = array<i64: 1, 1, 2, 128>}, {transform_indices = @transform_5, window_bounds = array<i64: 1, 1, 2, 128>}]} {
    %c0 = arith.constant 0 : index
    %0 = memref.load %arg4[%c0] : memref<63xf32, #tpu.memory_space<smem>>
    %c1 = arith.constant 1 : index
    %1 = memref.load %arg4[%c1] : memref<63xf32, #tpu.memory_space<smem>>
    %c2 = arith.constant 2 : index
    %2 = memref.load %arg4[%c2] : memref<63xf32, #tpu.memory_space<smem>>
    %c3 = arith.constant 3 : index
    %3 = memref.load %arg4[%c3] : memref<63xf32, #tpu.memory_space<smem>>
    %c4 = arith.constant 4 : index
    %4 = memref.load %arg4[%c4] : memref<63xf32, #tpu.memory_space<smem>>
    %c5 = arith.constant 5 : index
    %5 = memref.load %arg4[%c5] : memref<63xf32, #tpu.memory_space<smem>>
    %c6 = arith.constant 6 : index
    %6 = memref.load %arg4[%c6] : memref<63xf32, #tpu.memory_space<smem>>
    %c7 = arith.constant 7 : index
    %7 = memref.load %arg4[%c7] : memref<63xf32, #tpu.memory_space<smem>>
    %c8 = arith.constant 8 : index
    %8 = memref.load %arg4[%c8] : memref<63xf32, #tpu.memory_space<smem>>
    %c9 = arith.constant 9 : index
    %9 = memref.load %arg4[%c9] : memref<63xf32, #tpu.memory_space<smem>>
    %c10 = arith.constant 10 : index
    %10 = memref.load %arg4[%c10] : memref<63xf32, #tpu.memory_space<smem>>
    %c11 = arith.constant 11 : index
    %11 = memref.load %arg4[%c11] : memref<63xf32, #tpu.memory_space<smem>>
    %c12 = arith.constant 12 : index
    %12 = memref.load %arg4[%c12] : memref<63xf32, #tpu.memory_space<smem>>
    %c13 = arith.constant 13 : index
    %13 = memref.load %arg4[%c13] : memref<63xf32, #tpu.memory_space<smem>>
    %c14 = arith.constant 14 : index
    %14 = memref.load %arg4[%c14] : memref<63xf32, #tpu.memory_space<smem>>
    %c15 = arith.constant 15 : index
    %15 = memref.load %arg4[%c15] : memref<63xf32, #tpu.memory_space<smem>>
    %c16 = arith.constant 16 : index
    %16 = memref.load %arg4[%c16] : memref<63xf32, #tpu.memory_space<smem>>
    %c17 = arith.constant 17 : index
    %17 = memref.load %arg4[%c17] : memref<63xf32, #tpu.memory_space<smem>>
    %c18 = arith.constant 18 : index
    %18 = memref.load %arg4[%c18] : memref<63xf32, #tpu.memory_space<smem>>
    %c19 = arith.constant 19 : index
    %19 = memref.load %arg4[%c19] : memref<63xf32, #tpu.memory_space<smem>>
    %c20 = arith.constant 20 : index
    %20 = memref.load %arg4[%c20] : memref<63xf32, #tpu.memory_space<smem>>
    %c21 = arith.constant 21 : index
    %21 = memref.load %arg4[%c21] : memref<63xf32, #tpu.memory_space<smem>>
    %c22 = arith.constant 22 : index
    %22 = memref.load %arg4[%c22] : memref<63xf32, #tpu.memory_space<smem>>
    %c23 = arith.constant 23 : index
    %23 = memref.load %arg4[%c23] : memref<63xf32, #tpu.memory_space<smem>>
    %c24 = arith.constant 24 : index
    %24 = memref.load %arg4[%c24] : memref<63xf32, #tpu.memory_space<smem>>
    %c25 = arith.constant 25 : index
    %25 = memref.load %arg4[%c25] : memref<63xf32, #tpu.memory_space<smem>>
    %c26 = arith.constant 26 : index
    %26 = memref.load %arg4[%c26] : memref<63xf32, #tpu.memory_space<smem>>
    %c27 = arith.constant 27 : index
    %27 = memref.load %arg4[%c27] : memref<63xf32, #tpu.memory_space<smem>>
    %c28 = arith.constant 28 : index
    %28 = memref.load %arg4[%c28] : memref<63xf32, #tpu.memory_space<smem>>
    %c29 = arith.constant 29 : index
    %29 = memref.load %arg4[%c29] : memref<63xf32, #tpu.memory_space<smem>>
    %c30 = arith.constant 30 : index
    %30 = memref.load %arg4[%c30] : memref<63xf32, #tpu.memory_space<smem>>
    %c31 = arith.constant 31 : index
    %31 = memref.load %arg4[%c31] : memref<63xf32, #tpu.memory_space<smem>>
    %c32 = arith.constant 32 : index
    %32 = memref.load %arg4[%c32] : memref<63xf32, #tpu.memory_space<smem>>
    %c33 = arith.constant 33 : index
    %33 = memref.load %arg4[%c33] : memref<63xf32, #tpu.memory_space<smem>>
    %c34 = arith.constant 34 : index
    %34 = memref.load %arg4[%c34] : memref<63xf32, #tpu.memory_space<smem>>
    %c35 = arith.constant 35 : index
    %35 = memref.load %arg4[%c35] : memref<63xf32, #tpu.memory_space<smem>>
    %c36 = arith.constant 36 : index
    %36 = memref.load %arg4[%c36] : memref<63xf32, #tpu.memory_space<smem>>
    %c37 = arith.constant 37 : index
    %37 = memref.load %arg4[%c37] : memref<63xf32, #tpu.memory_space<smem>>
    %c38 = arith.constant 38 : index
    %38 = memref.load %arg4[%c38] : memref<63xf32, #tpu.memory_space<smem>>
    %c39 = arith.constant 39 : index
    %39 = memref.load %arg4[%c39] : memref<63xf32, #tpu.memory_space<smem>>
    %c40 = arith.constant 40 : index
    %40 = memref.load %arg4[%c40] : memref<63xf32, #tpu.memory_space<smem>>
    %c41 = arith.constant 41 : index
    %41 = memref.load %arg4[%c41] : memref<63xf32, #tpu.memory_space<smem>>
    %c42 = arith.constant 42 : index
    %42 = memref.load %arg4[%c42] : memref<63xf32, #tpu.memory_space<smem>>
    %c43 = arith.constant 43 : index
    %43 = memref.load %arg4[%c43] : memref<63xf32, #tpu.memory_space<smem>>
    %c44 = arith.constant 44 : index
    %44 = memref.load %arg4[%c44] : memref<63xf32, #tpu.memory_space<smem>>
    %c45 = arith.constant 45 : index
    %45 = memref.load %arg4[%c45] : memref<63xf32, #tpu.memory_space<smem>>
    %c46 = arith.constant 46 : index
    %46 = memref.load %arg4[%c46] : memref<63xf32, #tpu.memory_space<smem>>
    %c47 = arith.constant 47 : index
    %47 = memref.load %arg4[%c47] : memref<63xf32, #tpu.memory_space<smem>>
    %c48 = arith.constant 48 : index
    %48 = memref.load %arg4[%c48] : memref<63xf32, #tpu.memory_space<smem>>
    %c49 = arith.constant 49 : index
    %49 = memref.load %arg4[%c49] : memref<63xf32, #tpu.memory_space<smem>>
    %c50 = arith.constant 50 : index
    %50 = memref.load %arg4[%c50] : memref<63xf32, #tpu.memory_space<smem>>
    %c51 = arith.constant 51 : index
    %51 = memref.load %arg4[%c51] : memref<63xf32, #tpu.memory_space<smem>>
    %c52 = arith.constant 52 : index
    %52 = memref.load %arg4[%c52] : memref<63xf32, #tpu.memory_space<smem>>
    %c53 = arith.constant 53 : index
    %53 = memref.load %arg4[%c53] : memref<63xf32, #tpu.memory_space<smem>>
    %c54 = arith.constant 54 : index
    %54 = memref.load %arg4[%c54] : memref<63xf32, #tpu.memory_space<smem>>
    %c55 = arith.constant 55 : index
    %55 = memref.load %arg4[%c55] : memref<63xf32, #tpu.memory_space<smem>>
    %c56 = arith.constant 56 : index
    %56 = memref.load %arg4[%c56] : memref<63xf32, #tpu.memory_space<smem>>
    %c57 = arith.constant 57 : index
    %57 = memref.load %arg4[%c57] : memref<63xf32, #tpu.memory_space<smem>>
    %c58 = arith.constant 58 : index
    %58 = memref.load %arg4[%c58] : memref<63xf32, #tpu.memory_space<smem>>
    %c59 = arith.constant 59 : index
    %59 = memref.load %arg4[%c59] : memref<63xf32, #tpu.memory_space<smem>>
    %c60 = arith.constant 60 : index
    %60 = memref.load %arg4[%c60] : memref<63xf32, #tpu.memory_space<smem>>
    %c61 = arith.constant 61 : index
    %61 = memref.load %arg4[%c61] : memref<63xf32, #tpu.memory_space<smem>>
    %c62 = arith.constant 62 : index
    %62 = memref.load %arg4[%c62] : memref<63xf32, #tpu.memory_space<smem>>
    %c0_0 = arith.constant 0 : index
    %63 = memref.load %arg5[%c0_0] : memref<21xf32, #tpu.memory_space<smem>>
    %c1_1 = arith.constant 1 : index
    %64 = memref.load %arg5[%c1_1] : memref<21xf32, #tpu.memory_space<smem>>
    %c2_2 = arith.constant 2 : index
    %65 = memref.load %arg5[%c2_2] : memref<21xf32, #tpu.memory_space<smem>>
    %c3_3 = arith.constant 3 : index
    %66 = memref.load %arg5[%c3_3] : memref<21xf32, #tpu.memory_space<smem>>
    %c4_4 = arith.constant 4 : index
    %67 = memref.load %arg5[%c4_4] : memref<21xf32, #tpu.memory_space<smem>>
    %c5_5 = arith.constant 5 : index
    %68 = memref.load %arg5[%c5_5] : memref<21xf32, #tpu.memory_space<smem>>
    %c6_6 = arith.constant 6 : index
    %69 = memref.load %arg5[%c6_6] : memref<21xf32, #tpu.memory_space<smem>>
    %c7_7 = arith.constant 7 : index
    %70 = memref.load %arg5[%c7_7] : memref<21xf32, #tpu.memory_space<smem>>
    %c8_8 = arith.constant 8 : index
    %71 = memref.load %arg5[%c8_8] : memref<21xf32, #tpu.memory_space<smem>>
    %c9_9 = arith.constant 9 : index
    %72 = memref.load %arg5[%c9_9] : memref<21xf32, #tpu.memory_space<smem>>
    %c10_10 = arith.constant 10 : index
    %73 = memref.load %arg5[%c10_10] : memref<21xf32, #tpu.memory_space<smem>>
    %c11_11 = arith.constant 11 : index
    %74 = memref.load %arg5[%c11_11] : memref<21xf32, #tpu.memory_space<smem>>
    %c12_12 = arith.constant 12 : index
    %75 = memref.load %arg5[%c12_12] : memref<21xf32, #tpu.memory_space<smem>>
    %c13_13 = arith.constant 13 : index
    %76 = memref.load %arg5[%c13_13] : memref<21xf32, #tpu.memory_space<smem>>
    %c14_14 = arith.constant 14 : index
    %77 = memref.load %arg5[%c14_14] : memref<21xf32, #tpu.memory_space<smem>>
    %c15_15 = arith.constant 15 : index
    %78 = memref.load %arg5[%c15_15] : memref<21xf32, #tpu.memory_space<smem>>
    %c16_16 = arith.constant 16 : index
    %79 = memref.load %arg5[%c16_16] : memref<21xf32, #tpu.memory_space<smem>>
    %c17_17 = arith.constant 17 : index
    %80 = memref.load %arg5[%c17_17] : memref<21xf32, #tpu.memory_space<smem>>
    %c18_18 = arith.constant 18 : index
    %81 = memref.load %arg5[%c18_18] : memref<21xf32, #tpu.memory_space<smem>>
    %c19_19 = arith.constant 19 : index
    %82 = memref.load %arg5[%c19_19] : memref<21xf32, #tpu.memory_space<smem>>
    %c20_20 = arith.constant 20 : index
    %83 = memref.load %arg5[%c20_20] : memref<21xf32, #tpu.memory_space<smem>>
    %cst = arith.constant 0.000000e+00 : f32
    %84 = vector.broadcast %cst : f32 to vector<2x128xf32>
    %cst_21 = arith.constant 0.000000e+00 : f32
    %85 = vector.broadcast %cst_21 : f32 to vector<2x128xf32>
    %c0_i32 = arith.constant 0 : i32
    %c2_i32 = arith.constant 2 : i32
    %86 = arith.muli %c0_i32, %c2_i32 : i32
    %87 = tpu.assume_multiple %86, 2 : i32
    %c0_22 = arith.constant 0 : index
    %c0_23 = arith.constant 0 : index
    %88 = arith.index_cast %87 : i32 to index
    %c0_24 = arith.constant 0 : index
    %89 = vector.load %arg2[%c0_22, %c0_23, %88, %c0_24] : memref<1x3x2x128xf32, #tpu.memory_space<vmem>>, vector<1x1x2x128xf32>
    %90 = vector.shape_cast %89 : vector<1x1x2x128xf32> to vector<2x128xf32>
    %c0_25 = arith.constant 0 : index
    %c1_26 = arith.constant 1 : index
    %91 = arith.index_cast %87 : i32 to index
    %c0_27 = arith.constant 0 : index
    %92 = vector.load %arg2[%c0_25, %c1_26, %91, %c0_27] : memref<1x3x2x128xf32, #tpu.memory_space<vmem>>, vector<1x1x2x128xf32>
    %93 = vector.shape_cast %92 : vector<1x1x2x128xf32> to vector<2x128xf32>
    %c0_28 = arith.constant 0 : index
    %c2_29 = arith.constant 2 : index
    %94 = arith.index_cast %87 : i32 to index
    %c0_30 = arith.constant 0 : index
    %95 = vector.load %arg2[%c0_28, %c2_29, %94, %c0_30] : memref<1x3x2x128xf32, #tpu.memory_space<vmem>>, vector<1x1x2x128xf32>
    %96 = vector.shape_cast %95 : vector<1x1x2x128xf32> to vector<2x128xf32>
    %c0_31 = arith.constant 0 : index
    %c0_32 = arith.constant 0 : index
    %97 = arith.index_cast %87 : i32 to index
    %c0_33 = arith.constant 0 : index
    %98 = vector.load %arg3[%c0_31, %c0_32, %97, %c0_33] : memref<1x3x2x128xf32, #tpu.memory_space<vmem>>, vector<1x1x2x128xf32>
    %99 = vector.shape_cast %98 : vector<1x1x2x128xf32> to vector<2x128xf32>
    %c0_34 = arith.constant 0 : index
    %c1_35 = arith.constant 1 : index
    %100 = arith.index_cast %87 : i32 to index
    %c0_36 = arith.constant 0 : index
    %101 = vector.load %arg3[%c0_34, %c1_35, %100, %c0_36] : memref<1x3x2x128xf32, #tpu.memory_space<vmem>>, vector<1x1x2x128xf32>
    %102 = vector.shape_cast %101 : vector<1x1x2x128xf32> to vector<2x128xf32>
    %c0_37 = arith.constant 0 : index
    %c2_38 = arith.constant 2 : index
    %103 = arith.index_cast %87 : i32 to index
    %c0_39 = arith.constant 0 : index
    %104 = vector.load %arg3[%c0_37, %c2_38, %103, %c0_39] : memref<1x3x2x128xf32, #tpu.memory_space<vmem>>, vector<1x1x2x128xf32>
    %105 = vector.shape_cast %104 : vector<1x1x2x128xf32> to vector<2x128xf32>
    %106 = arith.subf %90, %99 : vector<2x128xf32>
    %107 = arith.subf %93, %102 : vector<2x128xf32>
    %108 = arith.subf %96, %105 : vector<2x128xf32>
    %109 = vector.broadcast %0 : f32 to vector<2x128xf32>
    %110 = arith.mulf %90, %109 : vector<2x128xf32>
    %111 = vector.broadcast %0 : f32 to vector<2x128xf32>
    %112 = arith.mulf %106, %111 : vector<2x128xf32>
    %113 = vector.broadcast %1 : f32 to vector<2x128xf32>
    %114 = arith.mulf %93, %113 : vector<2x128xf32>
    %115 = arith.addf %110, %114 : vector<2x128xf32>
    %116 = vector.broadcast %1 : f32 to vector<2x128xf32>
    %117 = arith.mulf %107, %116 : vector<2x128xf32>
    %118 = arith.addf %112, %117 : vector<2x128xf32>
    %119 = vector.broadcast %2 : f32 to vector<2x128xf32>
    %120 = arith.mulf %96, %119 : vector<2x128xf32>
    %121 = arith.addf %115, %120 : vector<2x128xf32>
    %122 = vector.broadcast %2 : f32 to vector<2x128xf32>
    %123 = arith.mulf %108, %122 : vector<2x128xf32>
    %124 = arith.addf %118, %123 : vector<2x128xf32>
    %125 = vector.broadcast %63 : f32 to vector<2x128xf32>
    %126 = arith.addf %121, %125 : vector<2x128xf32>
    %127 = math.absf %124 : vector<2x128xf32>
    %128 = arith.subf %126, %124 : vector<2x128xf32>
    %c0_i32_40 = arith.constant 0 : i32
    %129 = vector.broadcast %c0_i32_40 : i32 to vector<2x128xi32>
    %c0_i32_41 = arith.constant 0 : i32
    %130 = vector.broadcast %c0_i32_41 : i32 to vector<2x128xi32>
    %131 = vector.broadcast %3 : f32 to vector<2x128xf32>
    %132 = arith.mulf %90, %131 : vector<2x128xf32>
    %133 = vector.broadcast %3 : f32 to vector<2x128xf32>
    %134 = arith.mulf %106, %133 : vector<2x128xf32>
    %135 = vector.broadcast %4 : f32 to vector<2x128xf32>
    %136 = arith.mulf %93, %135 : vector<2x128xf32>
    %137 = arith.addf %132, %136 : vector<2x128xf32>
    %138 = vector.broadcast %4 : f32 to vector<2x128xf32>
    %139 = arith.mulf %107, %138 : vector<2x128xf32>
    %140 = arith.addf %134, %139 : vector<2x128xf32>
    %141 = vector.broadcast %5 : f32 to vector<2x128xf32>
    %142 = arith.mulf %96, %141 : vector<2x128xf32>
    %143 = arith.addf %137, %142 : vector<2x128xf32>
    %144 = vector.broadcast %5 : f32 to vector<2x128xf32>
    %145 = arith.mulf %108, %144 : vector<2x128xf32>
    %146 = arith.addf %140, %145 : vector<2x128xf32>
    %147 = vector.broadcast %64 : f32 to vector<2x128xf32>
    %148 = arith.addf %143, %147 : vector<2x128xf32>
    %149 = arith.subf %148, %146 : vector<2x128xf32>
    %150 = math.absf %146 : vector<2x128xf32>
    %151 = arith.addf %127, %150 : vector<2x128xf32>
    %152 = arith.cmpf ogt, %148, %126 : vector<2x128xf32>
    %153 = arith.select %152, %148, %126 : vector<2x128xi1>, vector<2x128xf32>
    %c1_i32 = arith.constant 1 : i32
    %154 = vector.broadcast %c1_i32 : i32 to vector<2x128xi32>
    %155 = arith.select %152, %154, %129 : vector<2x128xi1>, vector<2x128xi32>
    %156 = arith.cmpf ogt, %149, %128 : vector<2x128xf32>
    %157 = arith.select %156, %149, %128 : vector<2x128xi1>, vector<2x128xf32>
    %c1_i32_42 = arith.constant 1 : i32
    %158 = vector.broadcast %c1_i32_42 : i32 to vector<2x128xi32>
    %159 = arith.select %156, %158, %130 : vector<2x128xi1>, vector<2x128xi32>
    %160 = vector.broadcast %6 : f32 to vector<2x128xf32>
    %161 = arith.mulf %90, %160 : vector<2x128xf32>
    %162 = vector.broadcast %6 : f32 to vector<2x128xf32>
    %163 = arith.mulf %106, %162 : vector<2x128xf32>
    %164 = vector.broadcast %7 : f32 to vector<2x128xf32>
    %165 = arith.mulf %93, %164 : vector<2x128xf32>
    %166 = arith.addf %161, %165 : vector<2x128xf32>
    %167 = vector.broadcast %7 : f32 to vector<2x128xf32>
    %168 = arith.mulf %107, %167 : vector<2x128xf32>
    %169 = arith.addf %163, %168 : vector<2x128xf32>
    %170 = vector.broadcast %8 : f32 to vector<2x128xf32>
    %171 = arith.mulf %96, %170 : vector<2x128xf32>
    %172 = arith.addf %166, %171 : vector<2x128xf32>
    %173 = vector.broadcast %8 : f32 to vector<2x128xf32>
    %174 = arith.mulf %108, %173 : vector<2x128xf32>
    %175 = arith.addf %169, %174 : vector<2x128xf32>
    %176 = vector.broadcast %65 : f32 to vector<2x128xf32>
    %177 = arith.addf %172, %176 : vector<2x128xf32>
    %178 = arith.subf %177, %175 : vector<2x128xf32>
    %179 = math.absf %175 : vector<2x128xf32>
    %180 = arith.addf %151, %179 : vector<2x128xf32>
    %181 = arith.cmpf ogt, %177, %153 : vector<2x128xf32>
    %182 = arith.select %181, %177, %153 : vector<2x128xi1>, vector<2x128xf32>
    %c2_i32_43 = arith.constant 2 : i32
    %183 = vector.broadcast %c2_i32_43 : i32 to vector<2x128xi32>
    %184 = arith.select %181, %183, %155 : vector<2x128xi1>, vector<2x128xi32>
    %185 = arith.cmpf ogt, %178, %157 : vector<2x128xf32>
    %186 = arith.select %185, %178, %157 : vector<2x128xi1>, vector<2x128xf32>
    %c2_i32_44 = arith.constant 2 : i32
    %187 = vector.broadcast %c2_i32_44 : i32 to vector<2x128xi32>
    %188 = arith.select %185, %187, %159 : vector<2x128xi1>, vector<2x128xi32>
    %189 = vector.broadcast %9 : f32 to vector<2x128xf32>
    %190 = arith.mulf %90, %189 : vector<2x128xf32>
    %191 = vector.broadcast %9 : f32 to vector<2x128xf32>
    %192 = arith.mulf %106, %191 : vector<2x128xf32>
    %193 = vector.broadcast %10 : f32 to vector<2x128xf32>
    %194 = arith.mulf %93, %193 : vector<2x128xf32>
    %195 = arith.addf %190, %194 : vector<2x128xf32>
    %196 = vector.broadcast %10 : f32 to vector<2x128xf32>
    %197 = arith.mulf %107, %196 : vector<2x128xf32>
    %198 = arith.addf %192, %197 : vector<2x128xf32>
    %199 = vector.broadcast %11 : f32 to vector<2x128xf32>
    %200 = arith.mulf %96, %199 : vector<2x128xf32>
    %201 = arith.addf %195, %200 : vector<2x128xf32>
    %202 = vector.broadcast %11 : f32 to vector<2x128xf32>
    %203 = arith.mulf %108, %202 : vector<2x128xf32>
    %204 = arith.addf %198, %203 : vector<2x128xf32>
    %205 = vector.broadcast %66 : f32 to vector<2x128xf32>
    %206 = arith.addf %201, %205 : vector<2x128xf32>
    %207 = arith.subf %206, %204 : vector<2x128xf32>
    %208 = math.absf %204 : vector<2x128xf32>
    %209 = arith.addf %180, %208 : vector<2x128xf32>
    %210 = arith.cmpf ogt, %206, %182 : vector<2x128xf32>
    %211 = arith.select %210, %206, %182 : vector<2x128xi1>, vector<2x128xf32>
    %c3_i32 = arith.constant 3 : i32
    %212 = vector.broadcast %c3_i32 : i32 to vector<2x128xi32>
    %213 = arith.select %210, %212, %184 : vector<2x128xi1>, vector<2x128xi32>
    %214 = arith.cmpf ogt, %207, %186 : vector<2x128xf32>
    %215 = arith.select %214, %207, %186 : vector<2x128xi1>, vector<2x128xf32>
    %c3_i32_45 = arith.constant 3 : i32
    %216 = vector.broadcast %c3_i32_45 : i32 to vector<2x128xi32>
    %217 = arith.select %214, %216, %188 : vector<2x128xi1>, vector<2x128xi32>
    %218 = vector.broadcast %12 : f32 to vector<2x128xf32>
    %219 = arith.mulf %90, %218 : vector<2x128xf32>
    %220 = vector.broadcast %12 : f32 to vector<2x128xf32>
    %221 = arith.mulf %106, %220 : vector<2x128xf32>
    %222 = vector.broadcast %13 : f32 to vector<2x128xf32>
    %223 = arith.mulf %93, %222 : vector<2x128xf32>
    %224 = arith.addf %219, %223 : vector<2x128xf32>
    %225 = vector.broadcast %13 : f32 to vector<2x128xf32>
    %226 = arith.mulf %107, %225 : vector<2x128xf32>
    %227 = arith.addf %221, %226 : vector<2x128xf32>
    %228 = vector.broadcast %14 : f32 to vector<2x128xf32>
    %229 = arith.mulf %96, %228 : vector<2x128xf32>
    %230 = arith.addf %224, %229 : vector<2x128xf32>
    %231 = vector.broadcast %14 : f32 to vector<2x128xf32>
    %232 = arith.mulf %108, %231 : vector<2x128xf32>
    %233 = arith.addf %227, %232 : vector<2x128xf32>
    %234 = vector.broadcast %67 : f32 to vector<2x128xf32>
    %235 = arith.addf %230, %234 : vector<2x128xf32>
    %236 = arith.subf %235, %233 : vector<2x128xf32>
    %237 = math.absf %233 : vector<2x128xf32>
    %238 = arith.addf %209, %237 : vector<2x128xf32>
    %239 = arith.cmpf ogt, %235, %211 : vector<2x128xf32>
    %240 = arith.select %239, %235, %211 : vector<2x128xi1>, vector<2x128xf32>
    %c4_i32 = arith.constant 4 : i32
    %241 = vector.broadcast %c4_i32 : i32 to vector<2x128xi32>
    %242 = arith.select %239, %241, %213 : vector<2x128xi1>, vector<2x128xi32>
    %243 = arith.cmpf ogt, %236, %215 : vector<2x128xf32>
    %244 = arith.select %243, %236, %215 : vector<2x128xi1>, vector<2x128xf32>
    %c4_i32_46 = arith.constant 4 : i32
    %245 = vector.broadcast %c4_i32_46 : i32 to vector<2x128xi32>
    %246 = arith.select %243, %245, %217 : vector<2x128xi1>, vector<2x128xi32>
    %247 = vector.broadcast %15 : f32 to vector<2x128xf32>
    %248 = arith.mulf %90, %247 : vector<2x128xf32>
    %249 = vector.broadcast %15 : f32 to vector<2x128xf32>
    %250 = arith.mulf %106, %249 : vector<2x128xf32>
    %251 = vector.broadcast %16 : f32 to vector<2x128xf32>
    %252 = arith.mulf %93, %251 : vector<2x128xf32>
    %253 = arith.addf %248, %252 : vector<2x128xf32>
    %254 = vector.broadcast %16 : f32 to vector<2x128xf32>
    %255 = arith.mulf %107, %254 : vector<2x128xf32>
    %256 = arith.addf %250, %255 : vector<2x128xf32>
    %257 = vector.broadcast %17 : f32 to vector<2x128xf32>
    %258 = arith.mulf %96, %257 : vector<2x128xf32>
    %259 = arith.addf %253, %258 : vector<2x128xf32>
    %260 = vector.broadcast %17 : f32 to vector<2x128xf32>
    %261 = arith.mulf %108, %260 : vector<2x128xf32>
    %262 = arith.addf %256, %261 : vector<2x128xf32>
    %263 = vector.broadcast %68 : f32 to vector<2x128xf32>
    %264 = arith.addf %259, %263 : vector<2x128xf32>
    %265 = arith.subf %264, %262 : vector<2x128xf32>
    %266 = math.absf %262 : vector<2x128xf32>
    %267 = arith.addf %238, %266 : vector<2x128xf32>
    %268 = arith.cmpf ogt, %264, %240 : vector<2x128xf32>
    %269 = arith.select %268, %264, %240 : vector<2x128xi1>, vector<2x128xf32>
    %c5_i32 = arith.constant 5 : i32
    %270 = vector.broadcast %c5_i32 : i32 to vector<2x128xi32>
    %271 = arith.select %268, %270, %242 : vector<2x128xi1>, vector<2x128xi32>
    %272 = arith.cmpf ogt, %265, %244 : vector<2x128xf32>
    %273 = arith.select %272, %265, %244 : vector<2x128xi1>, vector<2x128xf32>
    %c5_i32_47 = arith.constant 5 : i32
    %274 = vector.broadcast %c5_i32_47 : i32 to vector<2x128xi32>
    %275 = arith.select %272, %274, %246 : vector<2x128xi1>, vector<2x128xi32>
    %276 = vector.broadcast %18 : f32 to vector<2x128xf32>
    %277 = arith.mulf %90, %276 : vector<2x128xf32>
    %278 = vector.broadcast %18 : f32 to vector<2x128xf32>
    %279 = arith.mulf %106, %278 : vector<2x128xf32>
    %280 = vector.broadcast %19 : f32 to vector<2x128xf32>
    %281 = arith.mulf %93, %280 : vector<2x128xf32>
    %282 = arith.addf %277, %281 : vector<2x128xf32>
    %283 = vector.broadcast %19 : f32 to vector<2x128xf32>
    %284 = arith.mulf %107, %283 : vector<2x128xf32>
    %285 = arith.addf %279, %284 : vector<2x128xf32>
    %286 = vector.broadcast %20 : f32 to vector<2x128xf32>
    %287 = arith.mulf %96, %286 : vector<2x128xf32>
    %288 = arith.addf %282, %287 : vector<2x128xf32>
    %289 = vector.broadcast %20 : f32 to vector<2x128xf32>
    %290 = arith.mulf %108, %289 : vector<2x128xf32>
    %291 = arith.addf %285, %290 : vector<2x128xf32>
    %292 = vector.broadcast %69 : f32 to vector<2x128xf32>
    %293 = arith.addf %288, %292 : vector<2x128xf32>
    %294 = arith.subf %293, %291 : vector<2x128xf32>
    %295 = math.absf %291 : vector<2x128xf32>
    %296 = arith.addf %267, %295 : vector<2x128xf32>
    %297 = arith.cmpf ogt, %293, %269 : vector<2x128xf32>
    %298 = arith.select %297, %293, %269 : vector<2x128xi1>, vector<2x128xf32>
    %c6_i32 = arith.constant 6 : i32
    %299 = vector.broadcast %c6_i32 : i32 to vector<2x128xi32>
    %300 = arith.select %297, %299, %271 : vector<2x128xi1>, vector<2x128xi32>
    %301 = arith.cmpf ogt, %294, %273 : vector<2x128xf32>
    %302 = arith.select %301, %294, %273 : vector<2x128xi1>, vector<2x128xf32>
    %c6_i32_48 = arith.constant 6 : i32
    %303 = vector.broadcast %c6_i32_48 : i32 to vector<2x128xi32>
    %304 = arith.select %301, %303, %275 : vector<2x128xi1>, vector<2x128xi32>
    %305 = vector.broadcast %21 : f32 to vector<2x128xf32>
    %306 = arith.mulf %90, %305 : vector<2x128xf32>
    %307 = vector.broadcast %21 : f32 to vector<2x128xf32>
    %308 = arith.mulf %106, %307 : vector<2x128xf32>
    %309 = vector.broadcast %22 : f32 to vector<2x128xf32>
    %310 = arith.mulf %93, %309 : vector<2x128xf32>
    %311 = arith.addf %306, %310 : vector<2x128xf32>
    %312 = vector.broadcast %22 : f32 to vector<2x128xf32>
    %313 = arith.mulf %107, %312 : vector<2x128xf32>
    %314 = arith.addf %308, %313 : vector<2x128xf32>
    %315 = vector.broadcast %23 : f32 to vector<2x128xf32>
    %316 = arith.mulf %96, %315 : vector<2x128xf32>
    %317 = arith.addf %311, %316 : vector<2x128xf32>
    %318 = vector.broadcast %23 : f32 to vector<2x128xf32>
    %319 = arith.mulf %108, %318 : vector<2x128xf32>
    %320 = arith.addf %314, %319 : vector<2x128xf32>
    %321 = vector.broadcast %70 : f32 to vector<2x128xf32>
    %322 = arith.addf %317, %321 : vector<2x128xf32>
    %323 = arith.subf %322, %320 : vector<2x128xf32>
    %324 = math.absf %320 : vector<2x128xf32>
    %325 = arith.addf %296, %324 : vector<2x128xf32>
    %326 = arith.cmpf ogt, %322, %298 : vector<2x128xf32>
    %327 = arith.select %326, %322, %298 : vector<2x128xi1>, vector<2x128xf32>
    %c7_i32 = arith.constant 7 : i32
    %328 = vector.broadcast %c7_i32 : i32 to vector<2x128xi32>
    %329 = arith.select %326, %328, %300 : vector<2x128xi1>, vector<2x128xi32>
    %330 = arith.cmpf ogt, %323, %302 : vector<2x128xf32>
    %331 = arith.select %330, %323, %302 : vector<2x128xi1>, vector<2x128xf32>
    %c7_i32_49 = arith.constant 7 : i32
    %332 = vector.broadcast %c7_i32_49 : i32 to vector<2x128xi32>
    %333 = arith.select %330, %332, %304 : vector<2x128xi1>, vector<2x128xi32>
    %334 = vector.broadcast %24 : f32 to vector<2x128xf32>
    %335 = arith.mulf %90, %334 : vector<2x128xf32>
    %336 = vector.broadcast %24 : f32 to vector<2x128xf32>
    %337 = arith.mulf %106, %336 : vector<2x128xf32>
    %338 = vector.broadcast %25 : f32 to vector<2x128xf32>
    %339 = arith.mulf %93, %338 : vector<2x128xf32>
    %340 = arith.addf %335, %339 : vector<2x128xf32>
    %341 = vector.broadcast %25 : f32 to vector<2x128xf32>
    %342 = arith.mulf %107, %341 : vector<2x128xf32>
    %343 = arith.addf %337, %342 : vector<2x128xf32>
    %344 = vector.broadcast %26 : f32 to vector<2x128xf32>
    %345 = arith.mulf %96, %344 : vector<2x128xf32>
    %346 = arith.addf %340, %345 : vector<2x128xf32>
    %347 = vector.broadcast %26 : f32 to vector<2x128xf32>
    %348 = arith.mulf %108, %347 : vector<2x128xf32>
    %349 = arith.addf %343, %348 : vector<2x128xf32>
    %350 = vector.broadcast %71 : f32 to vector<2x128xf32>
    %351 = arith.addf %346, %350 : vector<2x128xf32>
    %352 = arith.subf %351, %349 : vector<2x128xf32>
    %353 = math.absf %349 : vector<2x128xf32>
    %354 = arith.addf %325, %353 : vector<2x128xf32>
    %355 = arith.cmpf ogt, %351, %327 : vector<2x128xf32>
    %356 = arith.select %355, %351, %327 : vector<2x128xi1>, vector<2x128xf32>
    %c8_i32 = arith.constant 8 : i32
    %357 = vector.broadcast %c8_i32 : i32 to vector<2x128xi32>
    %358 = arith.select %355, %357, %329 : vector<2x128xi1>, vector<2x128xi32>
    %359 = arith.cmpf ogt, %352, %331 : vector<2x128xf32>
    %360 = arith.select %359, %352, %331 : vector<2x128xi1>, vector<2x128xf32>
    %c8_i32_50 = arith.constant 8 : i32
    %361 = vector.broadcast %c8_i32_50 : i32 to vector<2x128xi32>
    %362 = arith.select %359, %361, %333 : vector<2x128xi1>, vector<2x128xi32>
    %363 = vector.broadcast %27 : f32 to vector<2x128xf32>
    %364 = arith.mulf %90, %363 : vector<2x128xf32>
    %365 = vector.broadcast %27 : f32 to vector<2x128xf32>
    %366 = arith.mulf %106, %365 : vector<2x128xf32>
    %367 = vector.broadcast %28 : f32 to vector<2x128xf32>
    %368 = arith.mulf %93, %367 : vector<2x128xf32>
    %369 = arith.addf %364, %368 : vector<2x128xf32>
    %370 = vector.broadcast %28 : f32 to vector<2x128xf32>
    %371 = arith.mulf %107, %370 : vector<2x128xf32>
    %372 = arith.addf %366, %371 : vector<2x128xf32>
    %373 = vector.broadcast %29 : f32 to vector<2x128xf32>
    %374 = arith.mulf %96, %373 : vector<2x128xf32>
    %375 = arith.addf %369, %374 : vector<2x128xf32>
    %376 = vector.broadcast %29 : f32 to vector<2x128xf32>
    %377 = arith.mulf %108, %376 : vector<2x128xf32>
    %378 = arith.addf %372, %377 : vector<2x128xf32>
    %379 = vector.broadcast %72 : f32 to vector<2x128xf32>
    %380 = arith.addf %375, %379 : vector<2x128xf32>
    %381 = arith.subf %380, %378 : vector<2x128xf32>
    %382 = math.absf %378 : vector<2x128xf32>
    %383 = arith.addf %354, %382 : vector<2x128xf32>
    %384 = arith.cmpf ogt, %380, %356 : vector<2x128xf32>
    %385 = arith.select %384, %380, %356 : vector<2x128xi1>, vector<2x128xf32>
    %c9_i32 = arith.constant 9 : i32
    %386 = vector.broadcast %c9_i32 : i32 to vector<2x128xi32>
    %387 = arith.select %384, %386, %358 : vector<2x128xi1>, vector<2x128xi32>
    %388 = arith.cmpf ogt, %381, %360 : vector<2x128xf32>
    %389 = arith.select %388, %381, %360 : vector<2x128xi1>, vector<2x128xf32>
    %c9_i32_51 = arith.constant 9 : i32
    %390 = vector.broadcast %c9_i32_51 : i32 to vector<2x128xi32>
    %391 = arith.select %388, %390, %362 : vector<2x128xi1>, vector<2x128xi32>
    %392 = vector.broadcast %30 : f32 to vector<2x128xf32>
    %393 = arith.mulf %90, %392 : vector<2x128xf32>
    %394 = vector.broadcast %30 : f32 to vector<2x128xf32>
    %395 = arith.mulf %106, %394 : vector<2x128xf32>
    %396 = vector.broadcast %31 : f32 to vector<2x128xf32>
    %397 = arith.mulf %93, %396 : vector<2x128xf32>
    %398 = arith.addf %393, %397 : vector<2x128xf32>
    %399 = vector.broadcast %31 : f32 to vector<2x128xf32>
    %400 = arith.mulf %107, %399 : vector<2x128xf32>
    %401 = arith.addf %395, %400 : vector<2x128xf32>
    %402 = vector.broadcast %32 : f32 to vector<2x128xf32>
    %403 = arith.mulf %96, %402 : vector<2x128xf32>
    %404 = arith.addf %398, %403 : vector<2x128xf32>
    %405 = vector.broadcast %32 : f32 to vector<2x128xf32>
    %406 = arith.mulf %108, %405 : vector<2x128xf32>
    %407 = arith.addf %401, %406 : vector<2x128xf32>
    %408 = vector.broadcast %73 : f32 to vector<2x128xf32>
    %409 = arith.addf %404, %408 : vector<2x128xf32>
    %410 = arith.subf %409, %407 : vector<2x128xf32>
    %411 = math.absf %407 : vector<2x128xf32>
    %412 = arith.addf %383, %411 : vector<2x128xf32>
    %413 = arith.cmpf ogt, %409, %385 : vector<2x128xf32>
    %414 = arith.select %413, %409, %385 : vector<2x128xi1>, vector<2x128xf32>
    %c10_i32 = arith.constant 10 : i32
    %415 = vector.broadcast %c10_i32 : i32 to vector<2x128xi32>
    %416 = arith.select %413, %415, %387 : vector<2x128xi1>, vector<2x128xi32>
    %417 = arith.cmpf ogt, %410, %389 : vector<2x128xf32>
    %418 = arith.select %417, %410, %389 : vector<2x128xi1>, vector<2x128xf32>
    %c10_i32_52 = arith.constant 10 : i32
    %419 = vector.broadcast %c10_i32_52 : i32 to vector<2x128xi32>
    %420 = arith.select %417, %419, %391 : vector<2x128xi1>, vector<2x128xi32>
    %421 = vector.broadcast %33 : f32 to vector<2x128xf32>
    %422 = arith.mulf %90, %421 : vector<2x128xf32>
    %423 = vector.broadcast %33 : f32 to vector<2x128xf32>
    %424 = arith.mulf %106, %423 : vector<2x128xf32>
    %425 = vector.broadcast %34 : f32 to vector<2x128xf32>
    %426 = arith.mulf %93, %425 : vector<2x128xf32>
    %427 = arith.addf %422, %426 : vector<2x128xf32>
    %428 = vector.broadcast %34 : f32 to vector<2x128xf32>
    %429 = arith.mulf %107, %428 : vector<2x128xf32>
    %430 = arith.addf %424, %429 : vector<2x128xf32>
    %431 = vector.broadcast %35 : f32 to vector<2x128xf32>
    %432 = arith.mulf %96, %431 : vector<2x128xf32>
    %433 = arith.addf %427, %432 : vector<2x128xf32>
    %434 = vector.broadcast %35 : f32 to vector<2x128xf32>
    %435 = arith.mulf %108, %434 : vector<2x128xf32>
    %436 = arith.addf %430, %435 : vector<2x128xf32>
    %437 = vector.broadcast %74 : f32 to vector<2x128xf32>
    %438 = arith.addf %433, %437 : vector<2x128xf32>
    %439 = arith.subf %438, %436 : vector<2x128xf32>
    %440 = math.absf %436 : vector<2x128xf32>
    %441 = arith.addf %412, %440 : vector<2x128xf32>
    %442 = arith.cmpf ogt, %438, %414 : vector<2x128xf32>
    %443 = arith.select %442, %438, %414 : vector<2x128xi1>, vector<2x128xf32>
    %c11_i32 = arith.constant 11 : i32
    %444 = vector.broadcast %c11_i32 : i32 to vector<2x128xi32>
    %445 = arith.select %442, %444, %416 : vector<2x128xi1>, vector<2x128xi32>
    %446 = arith.cmpf ogt, %439, %418 : vector<2x128xf32>
    %447 = arith.select %446, %439, %418 : vector<2x128xi1>, vector<2x128xf32>
    %c11_i32_53 = arith.constant 11 : i32
    %448 = vector.broadcast %c11_i32_53 : i32 to vector<2x128xi32>
    %449 = arith.select %446, %448, %420 : vector<2x128xi1>, vector<2x128xi32>
    %450 = vector.broadcast %36 : f32 to vector<2x128xf32>
    %451 = arith.mulf %90, %450 : vector<2x128xf32>
    %452 = vector.broadcast %36 : f32 to vector<2x128xf32>
    %453 = arith.mulf %106, %452 : vector<2x128xf32>
    %454 = vector.broadcast %37 : f32 to vector<2x128xf32>
    %455 = arith.mulf %93, %454 : vector<2x128xf32>
    %456 = arith.addf %451, %455 : vector<2x128xf32>
    %457 = vector.broadcast %37 : f32 to vector<2x128xf32>
    %458 = arith.mulf %107, %457 : vector<2x128xf32>
    %459 = arith.addf %453, %458 : vector<2x128xf32>
    %460 = vector.broadcast %38 : f32 to vector<2x128xf32>
    %461 = arith.mulf %96, %460 : vector<2x128xf32>
    %462 = arith.addf %456, %461 : vector<2x128xf32>
    %463 = vector.broadcast %38 : f32 to vector<2x128xf32>
    %464 = arith.mulf %108, %463 : vector<2x128xf32>
    %465 = arith.addf %459, %464 : vector<2x128xf32>
    %466 = vector.broadcast %75 : f32 to vector<2x128xf32>
    %467 = arith.addf %462, %466 : vector<2x128xf32>
    %468 = arith.subf %467, %465 : vector<2x128xf32>
    %469 = math.absf %465 : vector<2x128xf32>
    %470 = arith.addf %441, %469 : vector<2x128xf32>
    %471 = arith.cmpf ogt, %467, %443 : vector<2x128xf32>
    %472 = arith.select %471, %467, %443 : vector<2x128xi1>, vector<2x128xf32>
    %c12_i32 = arith.constant 12 : i32
    %473 = vector.broadcast %c12_i32 : i32 to vector<2x128xi32>
    %474 = arith.select %471, %473, %445 : vector<2x128xi1>, vector<2x128xi32>
    %475 = arith.cmpf ogt, %468, %447 : vector<2x128xf32>
    %476 = arith.select %475, %468, %447 : vector<2x128xi1>, vector<2x128xf32>
    %c12_i32_54 = arith.constant 12 : i32
    %477 = vector.broadcast %c12_i32_54 : i32 to vector<2x128xi32>
    %478 = arith.select %475, %477, %449 : vector<2x128xi1>, vector<2x128xi32>
    %479 = vector.broadcast %39 : f32 to vector<2x128xf32>
    %480 = arith.mulf %90, %479 : vector<2x128xf32>
    %481 = vector.broadcast %39 : f32 to vector<2x128xf32>
    %482 = arith.mulf %106, %481 : vector<2x128xf32>
    %483 = vector.broadcast %40 : f32 to vector<2x128xf32>
    %484 = arith.mulf %93, %483 : vector<2x128xf32>
    %485 = arith.addf %480, %484 : vector<2x128xf32>
    %486 = vector.broadcast %40 : f32 to vector<2x128xf32>
    %487 = arith.mulf %107, %486 : vector<2x128xf32>
    %488 = arith.addf %482, %487 : vector<2x128xf32>
    %489 = vector.broadcast %41 : f32 to vector<2x128xf32>
    %490 = arith.mulf %96, %489 : vector<2x128xf32>
    %491 = arith.addf %485, %490 : vector<2x128xf32>
    %492 = vector.broadcast %41 : f32 to vector<2x128xf32>
    %493 = arith.mulf %108, %492 : vector<2x128xf32>
    %494 = arith.addf %488, %493 : vector<2x128xf32>
    %495 = vector.broadcast %76 : f32 to vector<2x128xf32>
    %496 = arith.addf %491, %495 : vector<2x128xf32>
    %497 = arith.subf %496, %494 : vector<2x128xf32>
    %498 = math.absf %494 : vector<2x128xf32>
    %499 = arith.addf %470, %498 : vector<2x128xf32>
    %500 = arith.cmpf ogt, %496, %472 : vector<2x128xf32>
    %501 = arith.select %500, %496, %472 : vector<2x128xi1>, vector<2x128xf32>
    %c13_i32 = arith.constant 13 : i32
    %502 = vector.broadcast %c13_i32 : i32 to vector<2x128xi32>
    %503 = arith.select %500, %502, %474 : vector<2x128xi1>, vector<2x128xi32>
    %504 = arith.cmpf ogt, %497, %476 : vector<2x128xf32>
    %505 = arith.select %504, %497, %476 : vector<2x128xi1>, vector<2x128xf32>
    %c13_i32_55 = arith.constant 13 : i32
    %506 = vector.broadcast %c13_i32_55 : i32 to vector<2x128xi32>
    %507 = arith.select %504, %506, %478 : vector<2x128xi1>, vector<2x128xi32>
    %508 = vector.broadcast %42 : f32 to vector<2x128xf32>
    %509 = arith.mulf %90, %508 : vector<2x128xf32>
    %510 = vector.broadcast %42 : f32 to vector<2x128xf32>
    %511 = arith.mulf %106, %510 : vector<2x128xf32>
    %512 = vector.broadcast %43 : f32 to vector<2x128xf32>
    %513 = arith.mulf %93, %512 : vector<2x128xf32>
    %514 = arith.addf %509, %513 : vector<2x128xf32>
    %515 = vector.broadcast %43 : f32 to vector<2x128xf32>
    %516 = arith.mulf %107, %515 : vector<2x128xf32>
    %517 = arith.addf %511, %516 : vector<2x128xf32>
    %518 = vector.broadcast %44 : f32 to vector<2x128xf32>
    %519 = arith.mulf %96, %518 : vector<2x128xf32>
    %520 = arith.addf %514, %519 : vector<2x128xf32>
    %521 = vector.broadcast %44 : f32 to vector<2x128xf32>
    %522 = arith.mulf %108, %521 : vector<2x128xf32>
    %523 = arith.addf %517, %522 : vector<2x128xf32>
    %524 = vector.broadcast %77 : f32 to vector<2x128xf32>
    %525 = arith.addf %520, %524 : vector<2x128xf32>
    %526 = arith.subf %525, %523 : vector<2x128xf32>
    %527 = math.absf %523 : vector<2x128xf32>
    %528 = arith.addf %499, %527 : vector<2x128xf32>
    %529 = arith.cmpf ogt, %525, %501 : vector<2x128xf32>
    %530 = arith.select %529, %525, %501 : vector<2x128xi1>, vector<2x128xf32>
    %c14_i32 = arith.constant 14 : i32
    %531 = vector.broadcast %c14_i32 : i32 to vector<2x128xi32>
    %532 = arith.select %529, %531, %503 : vector<2x128xi1>, vector<2x128xi32>
    %533 = arith.cmpf ogt, %526, %505 : vector<2x128xf32>
    %534 = arith.select %533, %526, %505 : vector<2x128xi1>, vector<2x128xf32>
    %c14_i32_56 = arith.constant 14 : i32
    %535 = vector.broadcast %c14_i32_56 : i32 to vector<2x128xi32>
    %536 = arith.select %533, %535, %507 : vector<2x128xi1>, vector<2x128xi32>
    %537 = vector.broadcast %45 : f32 to vector<2x128xf32>
    %538 = arith.mulf %90, %537 : vector<2x128xf32>
    %539 = vector.broadcast %45 : f32 to vector<2x128xf32>
    %540 = arith.mulf %106, %539 : vector<2x128xf32>
    %541 = vector.broadcast %46 : f32 to vector<2x128xf32>
    %542 = arith.mulf %93, %541 : vector<2x128xf32>
    %543 = arith.addf %538, %542 : vector<2x128xf32>
    %544 = vector.broadcast %46 : f32 to vector<2x128xf32>
    %545 = arith.mulf %107, %544 : vector<2x128xf32>
    %546 = arith.addf %540, %545 : vector<2x128xf32>
    %547 = vector.broadcast %47 : f32 to vector<2x128xf32>
    %548 = arith.mulf %96, %547 : vector<2x128xf32>
    %549 = arith.addf %543, %548 : vector<2x128xf32>
    %550 = vector.broadcast %47 : f32 to vector<2x128xf32>
    %551 = arith.mulf %108, %550 : vector<2x128xf32>
    %552 = arith.addf %546, %551 : vector<2x128xf32>
    %553 = vector.broadcast %78 : f32 to vector<2x128xf32>
    %554 = arith.addf %549, %553 : vector<2x128xf32>
    %555 = arith.subf %554, %552 : vector<2x128xf32>
    %556 = math.absf %552 : vector<2x128xf32>
    %557 = arith.addf %528, %556 : vector<2x128xf32>
    %558 = arith.cmpf ogt, %554, %530 : vector<2x128xf32>
    %559 = arith.select %558, %554, %530 : vector<2x128xi1>, vector<2x128xf32>
    %c15_i32 = arith.constant 15 : i32
    %560 = vector.broadcast %c15_i32 : i32 to vector<2x128xi32>
    %561 = arith.select %558, %560, %532 : vector<2x128xi1>, vector<2x128xi32>
    %562 = arith.cmpf ogt, %555, %534 : vector<2x128xf32>
    %563 = arith.select %562, %555, %534 : vector<2x128xi1>, vector<2x128xf32>
    %c15_i32_57 = arith.constant 15 : i32
    %564 = vector.broadcast %c15_i32_57 : i32 to vector<2x128xi32>
    %565 = arith.select %562, %564, %536 : vector<2x128xi1>, vector<2x128xi32>
    %566 = vector.broadcast %48 : f32 to vector<2x128xf32>
    %567 = arith.mulf %90, %566 : vector<2x128xf32>
    %568 = vector.broadcast %48 : f32 to vector<2x128xf32>
    %569 = arith.mulf %106, %568 : vector<2x128xf32>
    %570 = vector.broadcast %49 : f32 to vector<2x128xf32>
    %571 = arith.mulf %93, %570 : vector<2x128xf32>
    %572 = arith.addf %567, %571 : vector<2x128xf32>
    %573 = vector.broadcast %49 : f32 to vector<2x128xf32>
    %574 = arith.mulf %107, %573 : vector<2x128xf32>
    %575 = arith.addf %569, %574 : vector<2x128xf32>
    %576 = vector.broadcast %50 : f32 to vector<2x128xf32>
    %577 = arith.mulf %96, %576 : vector<2x128xf32>
    %578 = arith.addf %572, %577 : vector<2x128xf32>
    %579 = vector.broadcast %50 : f32 to vector<2x128xf32>
    %580 = arith.mulf %108, %579 : vector<2x128xf32>
    %581 = arith.addf %575, %580 : vector<2x128xf32>
    %582 = vector.broadcast %79 : f32 to vector<2x128xf32>
    %583 = arith.addf %578, %582 : vector<2x128xf32>
    %584 = arith.subf %583, %581 : vector<2x128xf32>
    %585 = math.absf %581 : vector<2x128xf32>
    %586 = arith.addf %557, %585 : vector<2x128xf32>
    %587 = arith.cmpf ogt, %583, %559 : vector<2x128xf32>
    %588 = arith.select %587, %583, %559 : vector<2x128xi1>, vector<2x128xf32>
    %c16_i32 = arith.constant 16 : i32
    %589 = vector.broadcast %c16_i32 : i32 to vector<2x128xi32>
    %590 = arith.select %587, %589, %561 : vector<2x128xi1>, vector<2x128xi32>
    %591 = arith.cmpf ogt, %584, %563 : vector<2x128xf32>
    %592 = arith.select %591, %584, %563 : vector<2x128xi1>, vector<2x128xf32>
    %c16_i32_58 = arith.constant 16 : i32
    %593 = vector.broadcast %c16_i32_58 : i32 to vector<2x128xi32>
    %594 = arith.select %591, %593, %565 : vector<2x128xi1>, vector<2x128xi32>
    %595 = vector.broadcast %51 : f32 to vector<2x128xf32>
    %596 = arith.mulf %90, %595 : vector<2x128xf32>
    %597 = vector.broadcast %51 : f32 to vector<2x128xf32>
    %598 = arith.mulf %106, %597 : vector<2x128xf32>
    %599 = vector.broadcast %52 : f32 to vector<2x128xf32>
    %600 = arith.mulf %93, %599 : vector<2x128xf32>
    %601 = arith.addf %596, %600 : vector<2x128xf32>
    %602 = vector.broadcast %52 : f32 to vector<2x128xf32>
    %603 = arith.mulf %107, %602 : vector<2x128xf32>
    %604 = arith.addf %598, %603 : vector<2x128xf32>
    %605 = vector.broadcast %53 : f32 to vector<2x128xf32>
    %606 = arith.mulf %96, %605 : vector<2x128xf32>
    %607 = arith.addf %601, %606 : vector<2x128xf32>
    %608 = vector.broadcast %53 : f32 to vector<2x128xf32>
    %609 = arith.mulf %108, %608 : vector<2x128xf32>
    %610 = arith.addf %604, %609 : vector<2x128xf32>
    %611 = vector.broadcast %80 : f32 to vector<2x128xf32>
    %612 = arith.addf %607, %611 : vector<2x128xf32>
    %613 = arith.subf %612, %610 : vector<2x128xf32>
    %614 = math.absf %610 : vector<2x128xf32>
    %615 = arith.addf %586, %614 : vector<2x128xf32>
    %616 = arith.cmpf ogt, %612, %588 : vector<2x128xf32>
    %617 = arith.select %616, %612, %588 : vector<2x128xi1>, vector<2x128xf32>
    %c17_i32 = arith.constant 17 : i32
    %618 = vector.broadcast %c17_i32 : i32 to vector<2x128xi32>
    %619 = arith.select %616, %618, %590 : vector<2x128xi1>, vector<2x128xi32>
    %620 = arith.cmpf ogt, %613, %592 : vector<2x128xf32>
    %621 = arith.select %620, %613, %592 : vector<2x128xi1>, vector<2x128xf32>
    %c17_i32_59 = arith.constant 17 : i32
    %622 = vector.broadcast %c17_i32_59 : i32 to vector<2x128xi32>
    %623 = arith.select %620, %622, %594 : vector<2x128xi1>, vector<2x128xi32>
    %624 = vector.broadcast %54 : f32 to vector<2x128xf32>
    %625 = arith.mulf %90, %624 : vector<2x128xf32>
    %626 = vector.broadcast %54 : f32 to vector<2x128xf32>
    %627 = arith.mulf %106, %626 : vector<2x128xf32>
    %628 = vector.broadcast %55 : f32 to vector<2x128xf32>
    %629 = arith.mulf %93, %628 : vector<2x128xf32>
    %630 = arith.addf %625, %629 : vector<2x128xf32>
    %631 = vector.broadcast %55 : f32 to vector<2x128xf32>
    %632 = arith.mulf %107, %631 : vector<2x128xf32>
    %633 = arith.addf %627, %632 : vector<2x128xf32>
    %634 = vector.broadcast %56 : f32 to vector<2x128xf32>
    %635 = arith.mulf %96, %634 : vector<2x128xf32>
    %636 = arith.addf %630, %635 : vector<2x128xf32>
    %637 = vector.broadcast %56 : f32 to vector<2x128xf32>
    %638 = arith.mulf %108, %637 : vector<2x128xf32>
    %639 = arith.addf %633, %638 : vector<2x128xf32>
    %640 = vector.broadcast %81 : f32 to vector<2x128xf32>
    %641 = arith.addf %636, %640 : vector<2x128xf32>
    %642 = arith.subf %641, %639 : vector<2x128xf32>
    %643 = math.absf %639 : vector<2x128xf32>
    %644 = arith.addf %615, %643 : vector<2x128xf32>
    %645 = arith.cmpf ogt, %641, %617 : vector<2x128xf32>
    %646 = arith.select %645, %641, %617 : vector<2x128xi1>, vector<2x128xf32>
    %c18_i32 = arith.constant 18 : i32
    %647 = vector.broadcast %c18_i32 : i32 to vector<2x128xi32>
    %648 = arith.select %645, %647, %619 : vector<2x128xi1>, vector<2x128xi32>
    %649 = arith.cmpf ogt, %642, %621 : vector<2x128xf32>
    %650 = arith.select %649, %642, %621 : vector<2x128xi1>, vector<2x128xf32>
    %c18_i32_60 = arith.constant 18 : i32
    %651 = vector.broadcast %c18_i32_60 : i32 to vector<2x128xi32>
    %652 = arith.select %649, %651, %623 : vector<2x128xi1>, vector<2x128xi32>
    %653 = vector.broadcast %57 : f32 to vector<2x128xf32>
    %654 = arith.mulf %90, %653 : vector<2x128xf32>
    %655 = vector.broadcast %57 : f32 to vector<2x128xf32>
    %656 = arith.mulf %106, %655 : vector<2x128xf32>
    %657 = vector.broadcast %58 : f32 to vector<2x128xf32>
    %658 = arith.mulf %93, %657 : vector<2x128xf32>
    %659 = arith.addf %654, %658 : vector<2x128xf32>
    %660 = vector.broadcast %58 : f32 to vector<2x128xf32>
    %661 = arith.mulf %107, %660 : vector<2x128xf32>
    %662 = arith.addf %656, %661 : vector<2x128xf32>
    %663 = vector.broadcast %59 : f32 to vector<2x128xf32>
    %664 = arith.mulf %96, %663 : vector<2x128xf32>
    %665 = arith.addf %659, %664 : vector<2x128xf32>
    %666 = vector.broadcast %59 : f32 to vector<2x128xf32>
    %667 = arith.mulf %108, %666 : vector<2x128xf32>
    %668 = arith.addf %662, %667 : vector<2x128xf32>
    %669 = vector.broadcast %82 : f32 to vector<2x128xf32>
    %670 = arith.addf %665, %669 : vector<2x128xf32>
    %671 = arith.subf %670, %668 : vector<2x128xf32>
    %672 = math.absf %668 : vector<2x128xf32>
    %673 = arith.addf %644, %672 : vector<2x128xf32>
    %674 = arith.cmpf ogt, %670, %646 : vector<2x128xf32>
    %675 = arith.select %674, %670, %646 : vector<2x128xi1>, vector<2x128xf32>
    %c19_i32 = arith.constant 19 : i32
    %676 = vector.broadcast %c19_i32 : i32 to vector<2x128xi32>
    %677 = arith.select %674, %676, %648 : vector<2x128xi1>, vector<2x128xi32>
    %678 = arith.cmpf ogt, %671, %650 : vector<2x128xf32>
    %679 = arith.select %678, %671, %650 : vector<2x128xi1>, vector<2x128xf32>
    %c19_i32_61 = arith.constant 19 : i32
    %680 = vector.broadcast %c19_i32_61 : i32 to vector<2x128xi32>
    %681 = arith.select %678, %680, %652 : vector<2x128xi1>, vector<2x128xi32>
    %682 = vector.broadcast %60 : f32 to vector<2x128xf32>
    %683 = arith.mulf %90, %682 : vector<2x128xf32>
    %684 = vector.broadcast %60 : f32 to vector<2x128xf32>
    %685 = arith.mulf %106, %684 : vector<2x128xf32>
    %686 = vector.broadcast %61 : f32 to vector<2x128xf32>
    %687 = arith.mulf %93, %686 : vector<2x128xf32>
    %688 = arith.addf %683, %687 : vector<2x128xf32>
    %689 = vector.broadcast %61 : f32 to vector<2x128xf32>
    %690 = arith.mulf %107, %689 : vector<2x128xf32>
    %691 = arith.addf %685, %690 : vector<2x128xf32>
    %692 = vector.broadcast %62 : f32 to vector<2x128xf32>
    %693 = arith.mulf %96, %692 : vector<2x128xf32>
    %694 = arith.addf %688, %693 : vector<2x128xf32>
    %695 = vector.broadcast %62 : f32 to vector<2x128xf32>
    %696 = arith.mulf %108, %695 : vector<2x128xf32>
    %697 = arith.addf %691, %696 : vector<2x128xf32>
    %698 = vector.broadcast %83 : f32 to vector<2x128xf32>
    %699 = arith.addf %694, %698 : vector<2x128xf32>
    %700 = arith.subf %699, %697 : vector<2x128xf32>
    %701 = math.absf %697 : vector<2x128xf32>
    %702 = arith.addf %673, %701 : vector<2x128xf32>
    %703 = arith.cmpf ogt, %699, %675 : vector<2x128xf32>
    %c20_i32 = arith.constant 20 : i32
    %704 = vector.broadcast %c20_i32 : i32 to vector<2x128xi32>
    %705 = arith.select %703, %704, %677 : vector<2x128xi1>, vector<2x128xi32>
    %706 = arith.cmpf ogt, %700, %679 : vector<2x128xf32>
    %c20_i32_62 = arith.constant 20 : i32
    %707 = vector.broadcast %c20_i32_62 : i32 to vector<2x128xi32>
    %708 = arith.select %706, %707, %681 : vector<2x128xi1>, vector<2x128xi32>
    %709 = arith.addf %84, %702 : vector<2x128xf32>
    %710 = arith.cmpi eq, %705, %708 : vector<2x128xi32>
    %711 = arith.extui %710 : vector<2x128xi1> to vector<2x128xi32>
    %712 = arith.sitofp %711 : vector<2x128xi32> to vector<2x128xf32>
    %713 = arith.addf %85, %712 : vector<2x128xf32>
    %c1_i32_63 = arith.constant 1 : i32
    %c0_64 = arith.constant 0 : index
    %c0_65 = arith.constant 0 : index
    %c0_66 = arith.constant 0 : index
    %c0_67 = arith.constant 0 : index
    %714 = vector.load %arg6[%c0_64, %c0_65, %c0_66, %c0_67] : memref<1x1x2x128xf32, #tpu.memory_space<vmem>>, vector<1x1x2x128xf32>
    %715 = vector.shape_cast %714 : vector<1x1x2x128xf32> to vector<2x128xf32>
    %716 = vector.shape_cast %709 : vector<2x128xf32> to vector<1x1x2x128xf32>
    tpu.vector_store %arg6[%c0_64, %c0_65, %c0_66, %c0_67], %716 {strides = array<i32>} : memref<1x1x2x128xf32, #tpu.memory_space<vmem>>, vector<1x1x2x128xf32>,
    %c0_68 = arith.constant 0 : index
    %c0_69 = arith.constant 0 : index
    %c0_70 = arith.constant 0 : index
    %c0_71 = arith.constant 0 : index
    %717 = vector.load %arg7[%c0_68, %c0_69, %c0_70, %c0_71] : memref<1x1x2x128xf32, #tpu.memory_space<vmem>>, vector<1x1x2x128xf32>
    %718 = vector.shape_cast %717 : vector<1x1x2x128xf32> to vector<2x128xf32>
    %719 = vector.shape_cast %713 : vector<2x128xf32> to vector<1x1x2x128xf32>
    tpu.vector_store %arg7[%c0_68, %c0_69, %c0_70, %c0_71], %719 {strides = array<i32>} : memref<1x1x2x128xf32, #tpu.memory_space<vmem>>, vector<1x1x2x128xf32>,
    return
  }
  func.func @transform_0(%arg0: i32, %arg1: i32) -> (i32, i32, i32, i32) {
    %c0_i32 = arith.constant 0 : i32
    %c0_i32_0 = arith.constant 0 : i32
    %c0_i32_1 = arith.constant 0 : i32
    return %arg0, %c0_i32, %arg1, %c0_i32_0 : i32, i32, i32, i32
  }
  func.func @transform_1(%arg0: i32, %arg1: i32) -> (i32, i32, i32, i32) {
    %c0_i32 = arith.constant 0 : i32
    %c0_i32_0 = arith.constant 0 : i32
    %c0_i32_1 = arith.constant 0 : i32
    return %arg0, %c0_i32, %arg1, %c0_i32_0 : i32, i32, i32, i32
  }
  func.func @transform_2(%arg0: i32, %arg1: i32) -> i32 {
    %c0_i32 = arith.constant 0 : i32
    %c0_i32_0 = arith.constant 0 : i32
    return %c0_i32 : i32
  }
  func.func @transform_3(%arg0: i32, %arg1: i32) -> i32 {
    %c0_i32 = arith.constant 0 : i32
    %c0_i32_0 = arith.constant 0 : i32
    return %c0_i32 : i32
  }
  func.func @transform_4(%arg0: i32, %arg1: i32) -> (i32, i32, i32, i32) {
    %c0_i32 = arith.constant 0 : i32
    %c0_i32_0 = arith.constant 0 : i32
    %c0_i32_1 = arith.constant 0 : i32
    return %arg0, %arg1, %c0_i32, %c0_i32_0 : i32, i32, i32, i32
  }
  func.func @transform_5(%arg0: i32, %arg1: i32) -> (i32, i32, i32, i32) {
    %c0_i32 = arith.constant 0 : i32
    %c0_i32_0 = arith.constant 0 : i32
    %c0_i32_1 = arith.constant 0 : i32
    return %arg0, %arg1, %c0_i32, %c0_i32_0 : i32, i32, i32, i32
  }
}

</mosaic_0001>

<llo_original>
// kernel: deeplabv3_loss.1
$region0: #{deeplabv3_loss.1}
  #allocation0 [shape = 'u32[]', space=smem, size = 0x4, offset = 0x4, fixed_abs, tag = 'smem constant byte address 0x4 - core index']
  #allocation1 [shape = 'u32[144,128]{1,0:T(1,128)}', space=vmem, size = 0x12000, scoped, tag = 'internal scratch']
  %s0 = inlined_call_operand.vmem [shape: f32[2,3,2,128], index: 0, kind: input, shape index: {}]
  %s1 = inlined_call_operand.vmem [shape: f32[2,3,2,128], index: 1, kind: input, shape index: {}]
  %s2 = inlined_call_operand.vmem [shape: f32[63], index: 2, kind: input, shape index: {}]
  %s3 = inlined_call_operand.vmem [shape: f32[21], index: 3, kind: input, shape index: {}]
  %s4 = inlined_call_operand.vmem [shape: f32[2,1,2,128], index: 4, kind: output, shape index: {0}]
  %s5 = inlined_call_operand.vmem [shape: f32[2,1,2,128], index: 5, kind: output, shape index: {1}]
  %6 = xla_tuple %s4, %s5
  %s7 = sld [smem:[#allocation0]]
  $region65: #{deeplabv3_loss.1} parent=0
    _
  %s9 = ssub.s32 1, %s7
  %s10 = scalar_select 0, %s9, %s7
  $region1: #{deeplabv3_loss.1} parent=0
    #allocation2 [shape = 'u8[512]{0}', space=smem, size = 0x200, scoped, tag = 'input window, operand 2, single buffered']
    #allocation3 [shape = 's32[2]{0}', space=sflag, size = 0x8, scoped, tag = 'scoped memory for deeplabv3_loss.1']
    #allocation4 [shape = 'u8[512]{0}', space=smem, size = 0x200, scoped, tag = 'input window, operand 3, single buffered']
    #allocation5 [shape = 's32[1]{0}', space=sflag, size = 0x4, scoped, tag = 'scoped memory for deeplabv3_loss.1']
    %11 = vsyncpa [#allocation3], 0
    %12 = vsyncpa [#allocation5], 0
    loop: start=0, step=1, limit=4
    $region2: #{deeplabv3_loss.1} parent=1 // loop_pre_header
      _
    $region3: #{deeplabv3_loss.1} parent=1 // loop_header
      %s14 = sphi 0, %s18
      %p15 = scmp.ge.s32.totalorder %s14, 4
      %s21 = sphi 0, %s33
      %s22 = sphi 0, %s29
      %s23 = sphi 0, %s21
      %s24 = sphi 0, %s22
      %s25 = sphi 0, %s23
      %s26 = sphi 0, %s24
      %s38 = sphi 0, %s40
      %s41 = sphi 0, %s38
      %s42 = sphi 0, %s41
      %s58 = sphi 0, %s42
      %s66 = sphi 0, %s68
      %s69 = sphi 0, %s66
      %s70 = sphi 0, %s69
      %s86 = sphi 0, %s70
      %s90 = sphi 0, %s90
      %s92 = sphi 0, %s90
      %s93 = sphi 0, %s92
      %s107 = sphi 0, %s93
      %s111 = sphi 0, %s111
      %s113 = sphi 0, %s111
      %s114 = sphi 0, %s113
      %s128 = sphi 0, %s114
      %s136 = sphi 0, %s138
      %s139 = sphi 0, %s136
      %s140 = sphi 0, %s139
      %s156 = sphi 0, %s140
      %s164 = sphi 0, %s166
      %s167 = sphi 0, %s164
      %s168 = sphi 0, %s167
      %s184 = sphi 0, %s168
    $region4: #{deeplabv3_loss.1} parent=1 // loop_header_branch
      %17 = sbr.rel (%p15) target = $region8
    $region5: #{deeplabv3_loss.1} parent=1 // loop_body
      %s19 = ssub.s32 %s14, 1
      %s20 = ssub.s32 %s14, 2
      %s27 = sadd.s32 1, %s22
      %p28 = scmp.ge.s32.totalorder %s27, 1
      %s29 = scalar_select %p28, 0, %s27
      %s30 = sadd.s32 1, %s21
      %s31 = scalar_select %p28, %s30, %s21
      %p32 = scmp.ge.s32.totalorder %s31, 2
      %s33 = scalar_select %p32, 0, %s31
      %s34 = ssub.s32 %s21, %s33
      %s35 = ssub.s32 %s22, %s29
      %s36 = sor.u32 %s34, %s35
      %p37 = scmp.eq.s32.totalorder %s36, 0
      %s39 = sadd.s32 %s38, 1
      %s40 = scalar_select %p37, %s38, %s39
      %p43 = pneg %p37
      %p44 = scmp.eq.s32.totalorder %s14, 1
      %p45 = por %p43, %p44
      %p46 = scmp.ne.s32.totalorder %s38, %s41
      %p47 = scmp.eq.s32.totalorder %s14, 0
      %p48 = por %p46, %p47
      %p49 = scmp.ne.s32.totalorder %s38, %s41
      %p50 = scmp.eq.s32.totalorder %s19, 1
      %p51 = por %p49, %p50
      %p52 = scmp.ne.s32.totalorder %s41, %s42
      %p53 = scmp.eq.s32.totalorder %s19, 0
      %p54 = por %p52, %p53
      %p55 = scmp.ne.s32.totalorder %s41, %s42
      %p56 = scmp.eq.s32.totalorder %s20, 1
      %p57 = por %p55, %p56
      %p59 = scmp.ne.s32.totalorder %s42, %s58
      %p60 = scmp.eq.s32.totalorder %s20, 0
      %p61 = por %p59, %p60
      %s62 = ssub.s32 %s21, %s33
      %s63 = ssub.s32 %s22, %s29
      %s64 = sor.u32 %s62, %s63
      %p65 = scmp.eq.s32.totalorder %s64, 0
      %s67 = sadd.s32 %s66, 1
      %s68 = scalar_select %p65, %s66, %s67
      %p71 = pneg %p65
      %p72 = scmp.eq.s32.totalorder %s14, 1
      %p73 = por %p71, %p72
      %p74 = scmp.ne.s32.totalorder %s66, %s69
      %p75 = scmp.eq.s32.totalorder %s14, 0
      %p76 = por %p74, %p75
      %p77 = scmp.ne.s32.totalorder %s66, %s69
      %p78 = scmp.eq.s32.totalorder %s19, 1
      %p79 = por %p77, %p78
      %p80 = scmp.ne.s32.totalorder %s69, %s70
      %p81 = scmp.eq.s32.totalorder %s19, 0
      %p82 = por %p80, %p81
      %p83 = scmp.ne.s32.totalorder %s69, %s70
      %p84 = scmp.eq.s32.totalorder %s20, 1
      %p85 = por %p83, %p84
      %p87 = scmp.ne.s32.totalorder %s70, %s86
      %p88 = scmp.eq.s32.totalorder %s20, 0
      %p89 = por %p87, %p88
      %s91 = sadd.s32 %s90, 1
      %p94 = scmp.eq.s32.totalorder %s14, 1
      %p95 = scmp.ne.s32.totalorder %s90, %s92
      %p96 = scmp.eq.s32.totalorder %s14, 0
      %p97 = por %p95, %p96
      %p98 = scmp.ne.s32.totalorder %s90, %s92
      %p99 = scmp.eq.s32.totalorder %s19, 1
      %p100 = por %p98, %p99
      %p101 = scmp.ne.s32.totalorder %s92, %s93
      %p102 = scmp.eq.s32.totalorder %s19, 0
      %p103 = por %p101, %p102
      %p104 = scmp.ne.s32.totalorder %s92, %s93
      %p105 = scmp.eq.s32.totalorder %s20, 1
      %p106 = por %p104, %p105
      %p108 = scmp.ne.s32.totalorder %s93, %s107
      %p109 = scmp.eq.s32.totalorder %s20, 0
      %p110 = por %p108, %p109
      %s112 = sadd.s32 %s111, 1
      %p115 = scmp.eq.s32.totalorder %s14, 1
      %p116 = scmp.ne.s32.totalorder %s111, %s113
      %p117 = scmp.eq.s32.totalorder %s14, 0
      %p118 = por %p116, %p117
      %p119 = scmp.ne.s32.totalorder %s111, %s113
      %p120 = scmp.eq.s32.totalorder %s19, 1
      %p121 = por %p119, %p120
      %p122 = scmp.ne.s32.totalorder %s113, %s114
      %p123 = scmp.eq.s32.totalorder %s19, 0
      %p124 = por %p122, %p123
      %p125 = scmp.ne.s32.totalorder %s113, %s114
      %p126 = scmp.eq.s32.totalorder %s20, 1
      %p127 = por %p125, %p126
      %p129 = scmp.ne.s32.totalorder %s114, %s128
      %p130 = scmp.eq.s32.totalorder %s20, 0
      %p131 = por %p129, %p130
      %s132 = ssub.s32 %s21, %s33
      %s133 = ssub.s32 %s22, %s29
      %s134 = sor.u32 %s132, %s133
      %p135 = scmp.eq.s32.totalorder %s134, 0
      %s137 = sadd.s32 %s136, 1
      %s138 = scalar_select %p135, %s136, %s137
      %p141 = pneg %p135
      %p142 = scmp.eq.s32.totalorder %s14, 1
      %p143 = por %p141, %p142
      %p144 = scmp.ne.s32.totalorder %s136, %s139
      %p145 = scmp.eq.s32.totalorder %s14, 0
      %p146 = por %p144, %p145
      %p147 = scmp.ne.s32.totalorder %s136, %s139
      %p148 = scmp.eq.s32.totalorder %s19, 1
      %p149 = por %p147, %p148
      %p150 = scmp.ne.s32.totalorder %s139, %s140
      %p151 = scmp.eq.s32.totalorder %s19, 0
      %p152 = por %p150, %p151
      %p153 = scmp.ne.s32.totalorder %s139, %s140
      %p154 = scmp.eq.s32.totalorder %s20, 1
      %p155 = por %p153, %p154
      %p157 = scmp.ne.s32.totalorder %s140, %s156
      %p158 = scmp.eq.s32.totalorder %s20, 0
      %p159 = por %p157, %p158
      %s160 = ssub.s32 %s21, %s33
      %s161 = ssub.s32 %s22, %s29
      %s162 = sor.u32 %s160, %s161
      %p163 = scmp.eq.s32.totalorder %s162, 0
      %s165 = sadd.s32 %s164, 1
      %s166 = scalar_select %p163, %s164, %s165
      %p169 = pneg %p163
      %p170 = scmp.eq.s32.totalorder %s14, 1
      %p171 = por %p169, %p170
      %p172 = scmp.ne.s32.totalorder %s164, %s167
      %p173 = scmp.eq.s32.totalorder %s14, 0
      %p174 = por %p172, %p173
      %p175 = scmp.ne.s32.totalorder %s164, %s167
      %p176 = scmp.eq.s32.totalorder %s19, 1
      %p177 = por %p175, %p176
      %p178 = scmp.ne.s32.totalorder %s167, %s168
      %p179 = scmp.eq.s32.totalorder %s19, 0
      %p180 = por %p178, %p179
      %p181 = scmp.ne.s32.totalorder %s167, %s168
      %p182 = scmp.eq.s32.totalorder %s20, 1
      %p183 = por %p181, %p182
      %p185 = scmp.ne.s32.totalorder %s168, %s184
      %p186 = scmp.eq.s32.totalorder %s20, 0
      %p187 = por %p185, %p186
      %p188 = scmp.le.s32.totalorder 1, %s14
      %p189 = scmp.lt.s32.totalorder %s14, 3
      %p190 = pnand %p188, %p189
      %p191 = pneg %p190
      // Predicated region
      $region9: #{deeplabv3_loss.1} parent=5 // pred_check
        _
      $region10: #{deeplabv3_loss.1} parent=5 // pred_check_branch
        %193 = sbr.rel (%p190) target = $region12
      $region11: #{deeplabv3_loss.1} parent=5 // pred_region
        %s194 = ssub.s32 %s14, 1
        // Predicated region
        $region13: #{deeplabv3_loss.1} parent=11 // pred_check
          %p195 = pneg %p103
        $region14: #{deeplabv3_loss.1} parent=11 // pred_check_branch
          %197 = sbr.rel (%p195) target = $region16
        $region15: #{deeplabv3_loss.1} parent=11 // pred_region
          %s199 = ssub.s32 16, 16
          %200 = vsyncadd [#allocation3], %s199
          %s202 = sshll.u32 %s2, 4
          %s203 = int_to_ptr.vmem [resolvable:$true] %s202
          %205 = dma.vmem_to_smem %s203, 16, [#allocation2], [#allocation3]
        $region16: #{deeplabv3_loss.1} parent=11 // pred_fallthru
          _
        // Predicated region
        $region17: #{deeplabv3_loss.1} parent=11 // pred_check
          %p206 = pneg %p124
        $region18: #{deeplabv3_loss.1} parent=11 // pred_check_branch
          %208 = sbr.rel (%p206) target = $region20
        $region19: #{deeplabv3_loss.1} parent=11 // pred_region
          %s210 = ssub.s32 16, 16
          %211 = vsyncadd [#allocation5], %s210
          %s213 = sshll.u32 %s3, 4
          %s214 = int_to_ptr.vmem [resolvable:$true] %s213
          %216 = dma.vmem_to_smem %s214, 16, [#allocation4], [#allocation5]
        $region20: #{deeplabv3_loss.1} parent=11 // pred_fallthru
          _
      $region12: #{deeplabv3_loss.1} parent=5 // pred_fallthru
        _
      %p217 = scmp.lt.s32.totalorder %s14, 2
      // Predicated region
      $region21: #{deeplabv3_loss.1} parent=5 // pred_check
        %p218 = pneg %p217
      $region22: #{deeplabv3_loss.1} parent=5 // pred_check_branch
        %220 = sbr.rel (%p218) target = $region24
      $region23: #{deeplabv3_loss.1} parent=5 // pred_region
        // Predicated region
        $region25: #{deeplabv3_loss.1} parent=23 // pred_check
          %p221 = pneg %p48
        $region26: #{deeplabv3_loss.1} parent=23 // pred_check_branch
          %223 = sbr.rel (%p221) target = $region28
        $region27: #{deeplabv3_loss.1} parent=23 // pred_region
          %p224 = scmp.lt.s32.totalorder %s21, 1
          %s225 = scalar_select %p224, %s21, 1
          %p226 = scmp.lt.s32.totalorder %s22, 0
          %s227 = scalar_select %p226, %s22, 0
          %s228 = smul.addr %s225, 3
          %s229 = sadd.s32 %s227, %s228
          %s230 = smul.addr %s229, 2
          %s231 = scalar_lea.vmem %s0, %s230
        $region28: #{deeplabv3_loss.1} parent=23 // pred_fallthru
          _
        // Predicated region
        $region29: #{deeplabv3_loss.1} parent=23 // pred_check
          %p232 = pneg %p76
        $region30: #{deeplabv3_loss.1} parent=23 // pred_check_branch
          %234 = sbr.rel (%p232) target = $region32
        $region31: #{deeplabv3_loss.1} parent=23 // pred_region
          %p235 = scmp.lt.s32.totalorder %s21, 1
          %s236 = scalar_select %p235, %s21, 1
          %p237 = scmp.lt.s32.totalorder %s22, 0
          %s238 = scalar_select %p237, %s22, 0
          %s239 = smul.addr %s236, 3
          %s240 = sadd.s32 %s238, %s239
          %s241 = smul.addr %s240, 2
          %s242 = scalar_lea.vmem %s1, %s241
        $region32: #{deeplabv3_loss.1} parent=23 // pred_fallthru
          _
      $region24: #{deeplabv3_loss.1} parent=5 // pred_fallthru
        _
      %p243 = scmp.le.s32.totalorder 1, %s14
      %p244 = scmp.lt.s32.totalorder %s14, 3
      %p245 = pnand %p243, %p244
      %p246 = pneg %p245
      // Predicated region
      $region33: #{deeplabv3_loss.1} parent=5 // pred_check
        _
      $region34: #{deeplabv3_loss.1} parent=5 // pred_check_branch
        %248 = sbr.rel (%p245) target = $region36
      $region35: #{deeplabv3_loss.1} parent=5 // pred_region
        %s249 = ssub.s32 %s14, 1
        // Predicated region
        $region37: #{deeplabv3_loss.1} parent=35 // pred_check
          %p250 = pneg %p103
        $region38: #{deeplabv3_loss.1} parent=35 // pred_check_branch
          %252 = sbr.rel (%p250) target = $region40
        $region39: #{deeplabv3_loss.1} parent=35 // pred_region
          %253 = dma.done [#allocation3], 16
        $region40: #{deeplabv3_loss.1} parent=35 // pred_fallthru
          _
        // Predicated region
        $region41: #{deeplabv3_loss.1} parent=35 // pred_check
          %p254 = pneg %p124
        $region42: #{deeplabv3_loss.1} parent=35 // pred_check_branch
          %256 = sbr.rel (%p254) target = $region44
        $region43: #{deeplabv3_loss.1} parent=35 // pred_region
          %257 = dma.done [#allocation5], 16
        $region44: #{deeplabv3_loss.1} parent=35 // pred_fallthru
          _
        %258 = sfence
        %p259 = scmp.lt.s32.totalorder %s23, 1
        %s260 = scalar_select %p259, %s23, 1
        %p261 = scmp.lt.s32.totalorder %s24, 0
        %s262 = scalar_select %p261, %s24, 0
        %s263 = smul.addr %s260, 3
        %s264 = sadd.s32 %s262, %s263
        %s265 = smul.addr %s264, 2
        %s266 = scalar_lea.vmem %s0, %s265
        %p267 = pneg %p54
        %p268 = pneg %p51
        %p269 = scmp.lt.s32.totalorder %s23, 1
        %s270 = scalar_select %p269, %s23, 1
        %p271 = scmp.lt.s32.totalorder %s24, 0
        %s272 = scalar_select %p271, %s24, 0
        %s273 = smul.addr %s270, 3
        %s274 = sadd.s32 %s272, %s273
        %s275 = smul.addr %s274, 2
        %s276 = scalar_lea.vmem %s1, %s275
        %p277 = pneg %p82
        %p278 = pneg %p79
        %p279 = pneg %p103
        %p280 = pneg %p100
        %p281 = pneg %p124
        %p282 = pneg %p121
        %p283 = pneg %p152
        %p284 = pneg %p149
        %p285 = scmp.lt.s32.totalorder %s23, 1
        %s286 = scalar_select %p285, %s23, 1
        %p287 = scmp.lt.s32.totalorder %s24, 0
        %s288 = scalar_select %p287, %s24, 0
        %s289 = sadd.s32 %s288, %s286
        %s290 = smul.addr %s289, 2
        %s291 = scalar_lea.vmem %s4, %s290
        %p292 = pneg %p180
        %p293 = pneg %p177
        %p294 = scmp.lt.s32.totalorder %s23, 1
        %s295 = scalar_select %p294, %s23, 1
        %p296 = scmp.lt.s32.totalorder %s24, 0
        %s297 = scalar_select %p296, %s24, 0
        %s298 = sadd.s32 %s297, %s295
        %s299 = smul.addr %s298, 2
        %s300 = scalar_lea.vmem %s5, %s299
        %p301 = scmp.lt.s32.totalorder %s23, 1
        %s302 = scalar_select %p301, %s23, 1
        %p303 = scmp.lt.s32.totalorder %s24, 0
        %s304 = scalar_select %p303, %s24, 0
        %s305 = smul.addr %s302, 3
        %s306 = sadd.s32 %s304, %s305
        %s307 = smul.addr %s306, 2
        %s308 = scalar_lea.vmem %s0, %s307
        %p309 = scmp.lt.s32.totalorder %s23, 1
        %s310 = scalar_select %p309, %s23, 1
        %p311 = scmp.lt.s32.totalorder %s24, 0
        %s312 = scalar_select %p311, %s24, 0
        %s313 = smul.addr %s310, 3
        %s314 = sadd.s32 %s312, %s313
        %s315 = smul.addr %s314, 2
        %s316 = scalar_lea.vmem %s1, %s315
        %p317 = scmp.lt.s32.totalorder %s23, 1
        %s318 = scalar_select %p317, %s23, 1
        %p319 = scmp.lt.s32.totalorder %s24, 0
        %s320 = scalar_select %p319, %s24, 0
        %s321 = sadd.s32 %s320, %s318
        %s322 = smul.addr %s321, 2
        %s323 = scalar_lea.vmem %s4, %s322
        %p324 = scmp.lt.s32.totalorder %s23, 1
        %s325 = scalar_select %p324, %s23, 1
        %p326 = scmp.lt.s32.totalorder %s24, 0
        %s327 = scalar_select %p326, %s24, 0
        %s328 = sadd.s32 %s327, %s325
        %s329 = smul.addr %s328, 2
        %s330 = scalar_lea.vmem %s5, %s329
        %s331 = sld [smem:[#allocation2]]
        %s332 = sld [smem:[#allocation2 + $0x1]]
        %s333 = sld [smem:[#allocation2 + $0x2]]
        %s334 = sld [smem:[#allocation2 + $0x3]]
        %s335 = sld [smem:[#allocation2 + $0x4]]
        %s336 = sld [smem:[#allocation2 + $0x5]]
        %s337 = sld [smem:[#allocation2 + $0x6]]
        %s338 = sld [smem:[#allocation2 + $0x7]]
        %s339 = sld [smem:[#allocation2 + $0x8]]
        %s340 = sld [smem:[#allocation2 + $0x9]]
        %s341 = sld [smem:[#allocation2 + $0xa]]
        %s342 = sld [smem:[#allocation2 + $0xb]]
        %s343 = sld [smem:[#allocation2 + $0xc]]
        %s344 = sld [smem:[#allocation2 + $0xd]]
        %s345 = sld [smem:[#allocation2 + $0xe]]
        %s346 = sld [smem:[#allocation2 + $0xf]]
        %s347 = sld [smem:[#allocation2 + $0x10]]
        %s348 = sld [smem:[#allocation2 + $0x11]]
        %s349 = sld [smem:[#allocation2 + $0x12]]
        %s350 = sld [smem:[#allocation2 + $0x13]]
        %s351 = sld [smem:[#allocation2 + $0x14]]
        %s352 = sld [smem:[#allocation2 + $0x15]]
        %s353 = sld [smem:[#allocation2 + $0x16]]
        %s354 = sld [smem:[#allocation2 + $0x17]]
        %s355 = sld [smem:[#allocation2 + $0x18]]
        %s356 = sld [smem:[#allocation2 + $0x19]]
        %s357 = sld [smem:[#allocation2 + $0x1a]]
        %s358 = sld [smem:[#allocation2 + $0x1b]]
        %s359 = sld [smem:[#allocation2 + $0x1c]]
        %s360 = sld [smem:[#allocation2 + $0x1d]]
        %s361 = sld [smem:[#allocation2 + $0x1e]]
        %s362 = sld [smem:[#allocation2 + $0x1f]]
        %s363 = sld [smem:[#allocation2 + $0x20]]
        %s364 = sld [smem:[#allocation2 + $0x21]]
        %s365 = sld [smem:[#allocation2 + $0x22]]
        %s366 = sld [smem:[#allocation2 + $0x23]]
        %s367 = sld [smem:[#allocation2 + $0x24]]
        %s368 = sld [smem:[#allocation2 + $0x25]]
        %s369 = sld [smem:[#allocation2 + $0x26]]
        %s370 = sld [smem:[#allocation2 + $0x27]]
        %s371 = sld [smem:[#allocation2 + $0x28]]
        %s372 = sld [smem:[#allocation2 + $0x29]]
        %s373 = sld [smem:[#allocation2 + $0x2a]]
        %s374 = sld [smem:[#allocation2 + $0x2b]]
        %s375 = sld [smem:[#allocation2 + $0x2c]]
        %s376 = sld [smem:[#allocation2 + $0x2d]]
        %s377 = sld [smem:[#allocation2 + $0x2e]]
        %s378 = sld [smem:[#allocation2 + $0x2f]]
        %s379 = sld [smem:[#allocation2 + $0x30]]
        %s380 = sld [smem:[#allocation2 + $0x31]]
        %s381 = sld [smem:[#allocation2 + $0x32]]
        %s382 = sld [smem:[#allocation2 + $0x33]]
        %s383 = sld [smem:[#allocation2 + $0x34]]
        %s384 = sld [smem:[#allocation2 + $0x35]]
        %s385 = sld [smem:[#allocation2 + $0x36]]
        %s386 = sld [smem:[#allocation2 + $0x37]]
        %s387 = sld [smem:[#allocation2 + $0x38]]
        %s388 = sld [smem:[#allocation2 + $0x39]]
        %s389 = sld [smem:[#allocation2 + $0x3a]]
        %s390 = sld [smem:[#allocation2 + $0x3b]]
        %s391 = sld [smem:[#allocation2 + $0x3c]]
        %s392 = sld [smem:[#allocation2 + $0x3d]]
        %s393 = sld [smem:[#allocation2 + $0x3e]]
        %s394 = sld [smem:[#allocation4]]
        %s395 = sld [smem:[#allocation4 + $0x1]]
        %s396 = sld [smem:[#allocation4 + $0x2]]
        %s397 = sld [smem:[#allocation4 + $0x3]]
        %s398 = sld [smem:[#allocation4 + $0x4]]
        %s399 = sld [smem:[#allocation4 + $0x5]]
        %s400 = sld [smem:[#allocation4 + $0x6]]
        %s401 = sld [smem:[#allocation4 + $0x7]]
        %s402 = sld [smem:[#allocation4 + $0x8]]
        %s403 = sld [smem:[#allocation4 + $0x9]]
        %s404 = sld [smem:[#allocation4 + $0xa]]
        %s405 = sld [smem:[#allocation4 + $0xb]]
        %s406 = sld [smem:[#allocation4 + $0xc]]
        %s407 = sld [smem:[#allocation4 + $0xd]]
        %s408 = sld [smem:[#allocation4 + $0xe]]
        %s409 = sld [smem:[#allocation4 + $0xf]]
        %s410 = sld [smem:[#allocation4 + $0x10]]
        %s411 = sld [smem:[#allocation4 + $0x11]]
        %s412 = sld [smem:[#allocation4 + $0x12]]
        %s413 = sld [smem:[#allocation4 + $0x13]]
        %s414 = sld [smem:[#allocation4 + $0x14]]
        %v415 = vld [vmem:[%s308] sm:$0x3]
        %s416 = sadd.s32 0, 2
        %s417 = scalar_lea.vmem %s308, %s416
        %v418 = vld [vmem:[%s417] sm:$0x3]
        %s419 = sadd.s32 0, 4
        %s420 = scalar_lea.vmem %s308, %s419
        %v421 = vld [vmem:[%s420] sm:$0x3]
        %v422 = vld [vmem:[%s316] sm:$0x3]
        %s423 = scalar_lea.vmem %s316, %s416
        %v424 = vld [vmem:[%s423] sm:$0x3]
        %s425 = scalar_lea.vmem %s316, %s419
        %v426 = vld [vmem:[%s425] sm:$0x3]
        %v427 = vsub.f32 %v415, %v422
        %v428 = vsub.f32 %v418, %v424
        %v429 = vsub.f32 %v421, %v426
        %v430 = vstv %s331
        %v431 = vmul.f32 %v415, %v430
        %v432 = vmul.f32 %v427, %v430
        %v433 = vstv %s332
        %v434 = vmul.f32 %v418, %v433
        %v435 = vadd.f32 %v431, %v434
        %v436 = vmul.f32 %v428, %v433
        %v437 = vadd.f32 %v432, %v436
        %v438 = vstv %s333
        %v439 = vmul.f32 %v421, %v438
        %v440 = vadd.f32 %v435, %v439
        %v441 = vmul.f32 %v429, %v438
        %v442 = vadd.f32 %v437, %v441
        %v443 = vstv %s394
        %v444 = vadd.f32 %v440, %v443
        %v445 = vand.u32 2147483647, %v442
        %v446 = vsub.f32 %v444, %v442
        %v447 = vstv %s334
        %v448 = vmul.f32 %v415, %v447
        %v449 = vmul.f32 %v427, %v447
        %v450 = vstv %s335
        %v451 = vmul.f32 %v418, %v450
        %v452 = vadd.f32 %v448, %v451
        %v453 = vmul.f32 %v428, %v450
        %v454 = vadd.f32 %v449, %v453
        %v455 = vstv %s336
        %v456 = vmul.f32 %v421, %v455
        %v457 = vadd.f32 %v452, %v456
        %v458 = vmul.f32 %v429, %v455
        %v459 = vadd.f32 %v454, %v458
        %v460 = vstv %s395
        %v461 = vadd.f32 %v457, %v460
        %v462 = vsub.f32 %v461, %v459
        %v463 = vand.u32 2147483647, %v459
        %v464 = vadd.f32 %v445, %v463
        %vm465 = vcmp.gt.f32.partialorder %v461, %v444
        %v466 = vsel %vm465, %v461, %v444
        %v467 = vsel %vm465, 1, 0
        %vm468 = vcmp.gt.f32.partialorder %v462, %v446
        %v469 = vsel %vm468, %v462, %v446
        %v470 = vsel %vm468, 1, 0
        %v471 = vstv %s337
        %v472 = vmul.f32 %v415, %v471
        %v473 = vmul.f32 %v427, %v471
        %v474 = vstv %s338
        %v475 = vmul.f32 %v418, %v474
        %v476 = vadd.f32 %v472, %v475
        %v477 = vmul.f32 %v428, %v474
        %v478 = vadd.f32 %v473, %v477
        %v479 = vstv %s339
        %v480 = vmul.f32 %v421, %v479
        %v481 = vadd.f32 %v476, %v480
        %v482 = vmul.f32 %v429, %v479
        %v483 = vadd.f32 %v478, %v482
        %v484 = vstv %s396
        %v485 = vadd.f32 %v481, %v484
        %v486 = vsub.f32 %v485, %v483
        %v487 = vand.u32 2147483647, %v483
        %v488 = vadd.f32 %v464, %v487
        %vm489 = vcmp.gt.f32.partialorder %v485, %v466
        %v490 = vsel %vm489, %v485, %v466
        %v491 = vsel %vm489, 2, %v467
        %vm492 = vcmp.gt.f32.partialorder %v486, %v469
        %v493 = vsel %vm492, %v486, %v469
        %v494 = vsel %vm492, 2, %v470
        %v495 = vstv %s340
        %v496 = vmul.f32 %v415, %v495
        %v497 = vmul.f32 %v427, %v495
        %v498 = vstv %s341
        %v499 = vmul.f32 %v418, %v498
        %v500 = vadd.f32 %v496, %v499
        %v501 = vmul.f32 %v428, %v498
        %v502 = vadd.f32 %v497, %v501
        %v503 = vstv %s342
        %v504 = vmul.f32 %v421, %v503
        %v505 = vadd.f32 %v500, %v504
        %v506 = vmul.f32 %v429, %v503
        %v507 = vadd.f32 %v502, %v506
        %v508 = vstv %s397
        %v509 = vadd.f32 %v505, %v508
        %v510 = vsub.f32 %v509, %v507
        %v511 = vand.u32 2147483647, %v507
        %v512 = vadd.f32 %v488, %v511
        %vm513 = vcmp.gt.f32.partialorder %v509, %v490
        %v514 = vsel %vm513, %v509, %v490
        %v515 = vsel %vm513, 3, %v491
        %vm516 = vcmp.gt.f32.partialorder %v510, %v493
        %v517 = vsel %vm516, %v510, %v493
        %v518 = vsel %vm516, 3, %v494
        %v519 = vstv %s343
        %v520 = vmul.f32 %v415, %v519
        %v521 = vmul.f32 %v427, %v519
        %v522 = vstv %s344
        %v523 = vmul.f32 %v418, %v522
        %v524 = vadd.f32 %v520, %v523
        %v525 = vmul.f32 %v428, %v522
        %v526 = vadd.f32 %v521, %v525
        %v527 = vstv %s345
        %v528 = vmul.f32 %v421, %v527
        %v529 = vadd.f32 %v524, %v528
        %v530 = vmul.f32 %v429, %v527
        %v531 = vadd.f32 %v526, %v530
        %v532 = vstv %s398
        %v533 = vadd.f32 %v529, %v532
        %v534 = vsub.f32 %v533, %v531
        %v535 = vand.u32 2147483647, %v531
        %v536 = vadd.f32 %v512, %v535
        %vm537 = vcmp.gt.f32.partialorder %v533, %v514
        %v538 = vsel %vm537, %v533, %v514
        %v539 = vsel %vm537, 4, %v515
        %vm540 = vcmp.gt.f32.partialorder %v534, %v517
        %v541 = vsel %vm540, %v534, %v517
        %v542 = vsel %vm540, 4, %v518
        %v543 = vstv %s346
        %v544 = vmul.f32 %v415, %v543
        %v545 = vmul.f32 %v427, %v543
        %v546 = vstv %s347
        %v547 = vmul.f32 %v418, %v546
        %v548 = vadd.f32 %v544, %v547
        %v549 = vmul.f32 %v428, %v546
        %v550 = vadd.f32 %v545, %v549
        %v551 = vstv %s348
        %v552 = vmul.f32 %v421, %v551
        %v553 = vadd.f32 %v548, %v552
        %v554 = vmul.f32 %v429, %v551
        %v555 = vadd.f32 %v550, %v554
        %v556 = vstv %s399
        %v557 = vadd.f32 %v553, %v556
        %v558 = vsub.f32 %v557, %v555
        %v559 = vand.u32 2147483647, %v555
        %v560 = vadd.f32 %v536, %v559
        %vm561 = vcmp.gt.f32.partialorder %v557, %v538
        %v562 = vsel %vm561, %v557, %v538
        %v563 = vsel %vm561, 5, %v539
        %vm564 = vcmp.gt.f32.partialorder %v558, %v541
        %v565 = vsel %vm564, %v558, %v541
        %v566 = vsel %vm564, 5, %v542
        %v567 = vstv %s349
        %v568 = vmul.f32 %v415, %v567
        %v569 = vmul.f32 %v427, %v567
        %v570 = vstv %s350
        %v571 = vmul.f32 %v418, %v570
        %v572 = vadd.f32 %v568, %v571
        %v573 = vmul.f32 %v428, %v570
        %v574 = vadd.f32 %v569, %v573
        %v575 = vstv %s351
        %v576 = vmul.f32 %v421, %v575
        %v577 = vadd.f32 %v572, %v576
        %v578 = vmul.f32 %v429, %v575
        %v579 = vadd.f32 %v574, %v578
        %v580 = vstv %s400
        %v581 = vadd.f32 %v577, %v580
        %v582 = vsub.f32 %v581, %v579
        %v583 = vand.u32 2147483647, %v579
        %v584 = vadd.f32 %v560, %v583
        %vm585 = vcmp.gt.f32.partialorder %v581, %v562
        %v586 = vsel %vm585, %v581, %v562
        %v587 = vsel %vm585, 6, %v563
        %vm588 = vcmp.gt.f32.partialorder %v582, %v565
        %v589 = vsel %vm588, %v582, %v565
        %v590 = vsel %vm588, 6, %v566
        %v591 = vstv %s352
        %v592 = vmul.f32 %v415, %v591
        %v593 = vmul.f32 %v427, %v591
        %v594 = vstv %s353
        %v595 = vmul.f32 %v418, %v594
        %v596 = vadd.f32 %v592, %v595
        %v597 = vmul.f32 %v428, %v594
        %v598 = vadd.f32 %v593, %v597
        %v599 = vstv %s354
        %v600 = vmul.f32 %v421, %v599
        %v601 = vadd.f32 %v596, %v600
        %v602 = vmul.f32 %v429, %v599
        %v603 = vadd.f32 %v598, %v602
        %v604 = vstv %s401
        %v605 = vadd.f32 %v601, %v604
        %v606 = vsub.f32 %v605, %v603
        %v607 = vand.u32 2147483647, %v603
        %v608 = vadd.f32 %v584, %v607
        %vm609 = vcmp.gt.f32.partialorder %v605, %v586
        %v610 = vsel %vm609, %v605, %v586
        %v611 = vsel %vm609, 7, %v587
        %vm612 = vcmp.gt.f32.partialorder %v606, %v589
        %v613 = vsel %vm612, %v606, %v589
        %v614 = vsel %vm612, 7, %v590
        %v615 = vstv %s355
        %v616 = vmul.f32 %v415, %v615
        %v617 = vmul.f32 %v427, %v615
        %v618 = vstv %s356
        %v619 = vmul.f32 %v418, %v618
        %v620 = vadd.f32 %v616, %v619
        %v621 = vmul.f32 %v428, %v618
        %v622 = vadd.f32 %v617, %v621
        %v623 = vstv %s357
        %v624 = vmul.f32 %v421, %v623
        %v625 = vadd.f32 %v620, %v624
        %v626 = vmul.f32 %v429, %v623
        %v627 = vadd.f32 %v622, %v626
        %v628 = vstv %s402
        %v629 = vadd.f32 %v625, %v628
        %v630 = vsub.f32 %v629, %v627
        %v631 = vand.u32 2147483647, %v627
        %v632 = vadd.f32 %v608, %v631
        %vm633 = vcmp.gt.f32.partialorder %v629, %v610
        %v634 = vsel %vm633, %v629, %v610
        %v635 = vsel %vm633, 8, %v611
        %vm636 = vcmp.gt.f32.partialorder %v630, %v613
        %v637 = vsel %vm636, %v630, %v613
        %v638 = vsel %vm636, 8, %v614
        %v639 = vstv %s358
        %v640 = vmul.f32 %v415, %v639
        %v641 = vmul.f32 %v427, %v639
        %v642 = vstv %s359
        %v643 = vmul.f32 %v418, %v642
        %v644 = vadd.f32 %v640, %v643
        %v645 = vmul.f32 %v428, %v642
        %v646 = vadd.f32 %v641, %v645
        %v647 = vstv %s360
        %v648 = vmul.f32 %v421, %v647
        %v649 = vadd.f32 %v644, %v648
        %v650 = vmul.f32 %v429, %v647
        %v651 = vadd.f32 %v646, %v650
        %v652 = vstv %s403
        %v653 = vadd.f32 %v649, %v652
        %v654 = vsub.f32 %v653, %v651
        %v655 = vand.u32 2147483647, %v651
        %v656 = vadd.f32 %v632, %v655
        %vm657 = vcmp.gt.f32.partialorder %v653, %v634
        %v658 = vsel %vm657, %v653, %v634
        %v659 = vsel %vm657, 9, %v635
        %vm660 = vcmp.gt.f32.partialorder %v654, %v637
        %v661 = vsel %vm660, %v654, %v637
        %v662 = vsel %vm660, 9, %v638
        %v663 = vstv %s361
        %v664 = vmul.f32 %v415, %v663
        %v665 = vmul.f32 %v427, %v663
        %v666 = vstv %s362
        %v667 = vmul.f32 %v418, %v666
        %v668 = vadd.f32 %v664, %v667
        %v669 = vmul.f32 %v428, %v666
        %v670 = vadd.f32 %v665, %v669
        %v671 = vstv %s363
        %v672 = vmul.f32 %v421, %v671
        %v673 = vadd.f32 %v668, %v672
        %v674 = vmul.f32 %v429, %v671
        %v675 = vadd.f32 %v670, %v674
        %v676 = vstv %s404
        %v677 = vadd.f32 %v673, %v676
        %v678 = vsub.f32 %v677, %v675
        %v679 = vand.u32 2147483647, %v675
        %v680 = vadd.f32 %v656, %v679
        %vm681 = vcmp.gt.f32.partialorder %v677, %v658
        %v682 = vsel %vm681, %v677, %v658
        %v683 = vsel %vm681, 10, %v659
        %vm684 = vcmp.gt.f32.partialorder %v678, %v661
        %v685 = vsel %vm684, %v678, %v661
        %v686 = vsel %vm684, 10, %v662
        %v687 = vstv %s364
        %v688 = vmul.f32 %v415, %v687
        %v689 = vmul.f32 %v427, %v687
        %v690 = vstv %s365
        %v691 = vmul.f32 %v418, %v690
        %v692 = vadd.f32 %v688, %v691
        %v693 = vmul.f32 %v428, %v690
        %v694 = vadd.f32 %v689, %v693
        %v695 = vstv %s366
        %v696 = vmul.f32 %v421, %v695
        %v697 = vadd.f32 %v692, %v696
        %v698 = vmul.f32 %v429, %v695
        %v699 = vadd.f32 %v694, %v698
        %v700 = vstv %s405
        %v701 = vadd.f32 %v697, %v700
        %v702 = vsub.f32 %v701, %v699
        %v703 = vand.u32 2147483647, %v699
        %v704 = vadd.f32 %v680, %v703
        %vm705 = vcmp.gt.f32.partialorder %v701, %v682
        %v706 = vsel %vm705, %v701, %v682
        %v707 = vsel %vm705, 11, %v683
        %vm708 = vcmp.gt.f32.partialorder %v702, %v685
        %v709 = vsel %vm708, %v702, %v685
        %v710 = vsel %vm708, 11, %v686
        %v711 = vstv %s367
        %v712 = vmul.f32 %v415, %v711
        %v713 = vmul.f32 %v427, %v711
        %v714 = vstv %s368
        %v715 = vmul.f32 %v418, %v714
        %v716 = vadd.f32 %v712, %v715
        %v717 = vmul.f32 %v428, %v714
        %v718 = vadd.f32 %v713, %v717
        %v719 = vstv %s369
        %v720 = vmul.f32 %v421, %v719
        %v721 = vadd.f32 %v716, %v720
        %v722 = vmul.f32 %v429, %v719
        %v723 = vadd.f32 %v718, %v722
        %v724 = vstv %s406
        %v725 = vadd.f32 %v721, %v724
        %v726 = vsub.f32 %v725, %v723
        %v727 = vand.u32 2147483647, %v723
        %v728 = vadd.f32 %v704, %v727
        %vm729 = vcmp.gt.f32.partialorder %v725, %v706
        %v730 = vsel %vm729, %v725, %v706
        %v731 = vsel %vm729, 12, %v707
        %vm732 = vcmp.gt.f32.partialorder %v726, %v709
        %v733 = vsel %vm732, %v726, %v709
        %v734 = vsel %vm732, 12, %v710
        %v735 = vstv %s370
        %v736 = vmul.f32 %v415, %v735
        %v737 = vmul.f32 %v427, %v735
        %v738 = vstv %s371
        %v739 = vmul.f32 %v418, %v738
        %v740 = vadd.f32 %v736, %v739
        %v741 = vmul.f32 %v428, %v738
        %v742 = vadd.f32 %v737, %v741
        %v743 = vstv %s372
        %v744 = vmul.f32 %v421, %v743
        %v745 = vadd.f32 %v740, %v744
        %v746 = vmul.f32 %v429, %v743
        %v747 = vadd.f32 %v742, %v746
        %v748 = vstv %s407
        %v749 = vadd.f32 %v745, %v748
        %v750 = vsub.f32 %v749, %v747
        %v751 = vand.u32 2147483647, %v747
        %v752 = vadd.f32 %v728, %v751
        %vm753 = vcmp.gt.f32.partialorder %v749, %v730
        %v754 = vsel %vm753, %v749, %v730
        %v755 = vsel %vm753, 13, %v731
        %vm756 = vcmp.gt.f32.partialorder %v750, %v733
        %v757 = vsel %vm756, %v750, %v733
        %v758 = vsel %vm756, 13, %v734
        %v759 = vstv %s373
        %v760 = vmul.f32 %v415, %v759
        %v761 = vmul.f32 %v427, %v759
        %v762 = vstv %s374
        %v763 = vmul.f32 %v418, %v762
        %v764 = vadd.f32 %v760, %v763
        %v765 = vmul.f32 %v428, %v762
        %v766 = vadd.f32 %v761, %v765
        %v767 = vstv %s375
        %v768 = vmul.f32 %v421, %v767
        %v769 = vadd.f32 %v764, %v768
        %v770 = vmul.f32 %v429, %v767
        %v771 = vadd.f32 %v766, %v770
        %v772 = vstv %s408
        %v773 = vadd.f32 %v769, %v772
        %v774 = vsub.f32 %v773, %v771
        %v775 = vand.u32 2147483647, %v771
        %v776 = vadd.f32 %v752, %v775
        %vm777 = vcmp.gt.f32.partialorder %v773, %v754
        %v778 = vsel %vm777, %v773, %v754
        %v779 = vsel %vm777, 14, %v755
        %vm780 = vcmp.gt.f32.partialorder %v774, %v757
        %v781 = vsel %vm780, %v774, %v757
        %v782 = vsel %vm780, 14, %v758
        %v783 = vstv %s376
        %v784 = vmul.f32 %v415, %v783
        %v785 = vmul.f32 %v427, %v783
        %v786 = vstv %s377
        %v787 = vmul.f32 %v418, %v786
        %v788 = vadd.f32 %v784, %v787
        %v789 = vmul.f32 %v428, %v786
        %v790 = vadd.f32 %v785, %v789
        %v791 = vstv %s378
        %v792 = vmul.f32 %v421, %v791
        %v793 = vadd.f32 %v788, %v792
        %v794 = vmul.f32 %v429, %v791
        %v795 = vadd.f32 %v790, %v794
        %v796 = vstv %s409
        %v797 = vadd.f32 %v793, %v796
        %v798 = vsub.f32 %v797, %v795
        %v799 = vand.u32 2147483647, %v795
        %v800 = vadd.f32 %v776, %v799
        %vm801 = vcmp.gt.f32.partialorder %v797, %v778
        %v802 = vsel %vm801, %v797, %v778
        %v803 = vsel %vm801, 15, %v779
        %vm804 = vcmp.gt.f32.partialorder %v798, %v781
        %v805 = vsel %vm804, %v798, %v781
        %v806 = vsel %vm804, 15, %v782
        %v807 = vstv %s379
        %v808 = vmul.f32 %v415, %v807
        %v809 = vmul.f32 %v427, %v807
        %v810 = vstv %s380
        %v811 = vmul.f32 %v418, %v810
        %v812 = vadd.f32 %v808, %v811
        %v813 = vmul.f32 %v428, %v810
        %v814 = vadd.f32 %v809, %v813
        %v815 = vstv %s381
        %v816 = vmul.f32 %v421, %v815
        %v817 = vadd.f32 %v812, %v816
        %v818 = vmul.f32 %v429, %v815
        %v819 = vadd.f32 %v814, %v818
        %v820 = vstv %s410
        %v821 = vadd.f32 %v817, %v820
        %v822 = vsub.f32 %v821, %v819
        %v823 = vand.u32 2147483647, %v819
        %v824 = vadd.f32 %v800, %v823
        %vm825 = vcmp.gt.f32.partialorder %v821, %v802
        %v826 = vsel %vm825, %v821, %v802
        %v827 = vsel %vm825, 16, %v803
        %vm828 = vcmp.gt.f32.partialorder %v822, %v805
        %v829 = vsel %vm828, %v822, %v805
        %v830 = vsel %vm828, 16, %v806
        %v831 = vstv %s382
        %v832 = vmul.f32 %v415, %v831
        %v833 = vmul.f32 %v427, %v831
        %v834 = vstv %s383
        %v835 = vmul.f32 %v418, %v834
        %v836 = vadd.f32 %v832, %v835
        %v837 = vmul.f32 %v428, %v834
        %v838 = vadd.f32 %v833, %v837
        %v839 = vstv %s384
        %v840 = vmul.f32 %v421, %v839
        %v841 = vadd.f32 %v836, %v840
        %v842 = vmul.f32 %v429, %v839
        %v843 = vadd.f32 %v838, %v842
        %v844 = vstv %s411
        %v845 = vadd.f32 %v841, %v844
        %v846 = vsub.f32 %v845, %v843
        %v847 = vand.u32 2147483647, %v843
        %v848 = vadd.f32 %v824, %v847
        %vm849 = vcmp.gt.f32.partialorder %v845, %v826
        %v850 = vsel %vm849, %v845, %v826
        %v851 = vsel %vm849, 17, %v827
        %vm852 = vcmp.gt.f32.partialorder %v846, %v829
        %v853 = vsel %vm852, %v846, %v829
        %v854 = vsel %vm852, 17, %v830
        %v855 = vstv %s385
        %v856 = vmul.f32 %v415, %v855
        %v857 = vmul.f32 %v427, %v855
        %v858 = vstv %s386
        %v859 = vmul.f32 %v418, %v858
        %v860 = vadd.f32 %v856, %v859
        %v861 = vmul.f32 %v428, %v858
        %v862 = vadd.f32 %v857, %v861
        %v863 = vstv %s387
        %v864 = vmul.f32 %v421, %v863
        %v865 = vadd.f32 %v860, %v864
        %v866 = vmul.f32 %v429, %v863
        %v867 = vadd.f32 %v862, %v866
        %v868 = vstv %s412
        %v869 = vadd.f32 %v865, %v868
        %v870 = vsub.f32 %v869, %v867
        %v871 = vand.u32 2147483647, %v867
        %v872 = vadd.f32 %v848, %v871
        %vm873 = vcmp.gt.f32.partialorder %v869, %v850
        %v874 = vsel %vm873, %v869, %v850
        %v875 = vsel %vm873, 18, %v851
        %vm876 = vcmp.gt.f32.partialorder %v870, %v853
        %v877 = vsel %vm876, %v870, %v853
        %v878 = vsel %vm876, 18, %v854
        %v879 = vstv %s388
        %v880 = vmul.f32 %v415, %v879
        %v881 = vmul.f32 %v427, %v879
        %v882 = vstv %s389
        %v883 = vmul.f32 %v418, %v882
        %v884 = vadd.f32 %v880, %v883
        %v885 = vmul.f32 %v428, %v882
        %v886 = vadd.f32 %v881, %v885
        %v887 = vstv %s390
        %v888 = vmul.f32 %v421, %v887
        %v889 = vadd.f32 %v884, %v888
        %v890 = vmul.f32 %v429, %v887
        %v891 = vadd.f32 %v886, %v890
        %v892 = vstv %s413
        %v893 = vadd.f32 %v889, %v892
        %v894 = vsub.f32 %v893, %v891
        %v895 = vand.u32 2147483647, %v891
        %v896 = vadd.f32 %v872, %v895
        %vm897 = vcmp.gt.f32.partialorder %v893, %v874
        %v898 = vsel %vm897, %v893, %v874
        %v899 = vsel %vm897, 19, %v875
        %vm900 = vcmp.gt.f32.partialorder %v894, %v877
        %v901 = vsel %vm900, %v894, %v877
        %v902 = vsel %vm900, 19, %v878
        %v903 = vstv %s391
        %v904 = vmul.f32 %v415, %v903
        %v905 = vmul.f32 %v427, %v903
        %v906 = vstv %s392
        %v907 = vmul.f32 %v418, %v906
        %v908 = vadd.f32 %v904, %v907
        %v909 = vmul.f32 %v428, %v906
        %v910 = vadd.f32 %v905, %v909
        %v911 = vstv %s393
        %v912 = vmul.f32 %v421, %v911
        %v913 = vadd.f32 %v908, %v912
        %v914 = vmul.f32 %v429, %v911
        %v915 = vadd.f32 %v910, %v914
        %v916 = vstv %s414
        %v917 = vadd.f32 %v913, %v916
        %v918 = vsub.f32 %v917, %v915
        %v919 = vand.u32 2147483647, %v915
        %v920 = vadd.f32 %v896, %v919
        %vm921 = vcmp.gt.f32.partialorder %v917, %v898
        %v922 = vsel %vm921, 20, %v899
        %vm923 = vcmp.gt.f32.partialorder %v918, %v901
        %v924 = vsel %vm923, 20, %v902
        %v925 = vadd.f32 %v920, 0.0
        %vm926 = vcmp.eq.s32.totalorder %v922, %v924
        %v927 = vsel %vm926, 1, 0
        %v928 = vcvt.s32.f32 %v927
        %v929 = vadd.f32 %v928, 0.0
        %930 = vst [vmem:[%s323] sm:$0x3] %v925
        %931 = vst [vmem:[%s330] sm:$0x3] %v929
        %p932 = scmp.lt.s32.totalorder %s23, 1
        %s933 = scalar_select %p932, %s23, 1
        %p934 = scmp.lt.s32.totalorder %s24, 0
        %s935 = scalar_select %p934, %s24, 0
        %s936 = sadd.s32 %s935, %s933
        %s937 = smul.addr %s936, 2
        %s938 = scalar_lea.vmem %s4, %s937
        %p939 = scmp.lt.s32.totalorder %s23, 1
        %s940 = scalar_select %p939, %s23, 1
        %p941 = scmp.lt.s32.totalorder %s24, 0
        %s942 = scalar_select %p941, %s24, 0
        %s943 = sadd.s32 %s942, %s940
        %s944 = smul.addr %s943, 2
        %s945 = scalar_lea.vmem %s5, %s944
        // Predicated region
        $region45: #{deeplabv3_loss.1} parent=35 // pred_check
          %p946 = pneg %p149
        $region46: #{deeplabv3_loss.1} parent=35 // pred_check_branch
          %948 = sbr.rel (%p946) target = $region48
        $region47: #{deeplabv3_loss.1} parent=35 // pred_region
          _
        $region48: #{deeplabv3_loss.1} parent=35 // pred_fallthru
          _
        // Predicated region
        $region49: #{deeplabv3_loss.1} parent=35 // pred_check
          %p949 = pneg %p177
        $region50: #{deeplabv3_loss.1} parent=35 // pred_check_branch
          %951 = sbr.rel (%p949) target = $region52
        $region51: #{deeplabv3_loss.1} parent=35 // pred_region
          _
        $region52: #{deeplabv3_loss.1} parent=35 // pred_fallthru
          _
      $region36: #{deeplabv3_loss.1} parent=5 // pred_fallthru
        _
      %p952 = scmp.le.s32.totalorder 2, %s14
      // Predicated region
      $region53: #{deeplabv3_loss.1} parent=5 // pred_check
        %p953 = pneg %p952
      $region54: #{deeplabv3_loss.1} parent=5 // pred_check_branch
        %955 = sbr.rel (%p953) target = $region56
      $region55: #{deeplabv3_loss.1} parent=5 // pred_region
        %s956 = ssub.s32 %s14, 2
        // Predicated region
        $region57: #{deeplabv3_loss.1} parent=55 // pred_check
          %p957 = pneg %p155
        $region58: #{deeplabv3_loss.1} parent=55 // pred_check_branch
          %959 = sbr.rel (%p957) target = $region60
        $region59: #{deeplabv3_loss.1} parent=55 // pred_region
          %p960 = scmp.lt.s32.totalorder %s25, 1
          %s961 = scalar_select %p960, %s25, 1
          %p962 = scmp.lt.s32.totalorder %s26, 0
          %s963 = scalar_select %p962, %s26, 0
          %s964 = sadd.s32 %s963, %s961
          %s965 = smul.addr %s964, 2
          %s966 = scalar_lea.vmem %s4, %s965
        $region60: #{deeplabv3_loss.1} parent=55 // pred_fallthru
          _
        // Predicated region
        $region61: #{deeplabv3_loss.1} parent=55 // pred_check
          %p967 = pneg %p183
        $region62: #{deeplabv3_loss.1} parent=55 // pred_check_branch
          %969 = sbr.rel (%p967) target = $region64
        $region63: #{deeplabv3_loss.1} parent=55 // pred_region
          %p970 = scmp.lt.s32.totalorder %s25, 1
          %s971 = scalar_select %p970, %s25, 1
          %p972 = scmp.lt.s32.totalorder %s26, 0
          %s973 = scalar_select %p972, %s26, 0
          %s974 = sadd.s32 %s973, %s971
          %s975 = smul.addr %s974, 2
          %s976 = scalar_lea.vmem %s5, %s975
        $region64: #{deeplabv3_loss.1} parent=55 // pred_fallthru
          _
      $region56: #{deeplabv3_loss.1} parent=5 // pred_fallthru
        _
    $region6: #{deeplabv3_loss.1} parent=1 // loop_footer
      %s18 = sadd.s32 1, %s14
    $region7: #{deeplabv3_loss.1} parent=1 // loop_footer_branch
      %13 = sbr.rel target = $region3
    $region8: #{deeplabv3_loss.1} parent=1 // loop_exit
      _
    %977 = vsyncpa [#allocation3], 1
    %s978 = scalar_lea.sflag [#allocation3], 1
    %979 = vsyncpa %s978, 1
    %980 = vsyncpa [#allocation5], 1

</llo_original>
